<compile_context>
chip_gen: v7x
topology: tpu7x:2x2x1
jax: 0.10.0
libtpu: 0.0.40
codegen_flags: <defaults>
</compile_context>

<pallas_src>
import functools

import jax
import jax.numpy as jnp
from jax.experimental import pallas as pl
from jax.experimental.pallas import tpu as pltpu

SUBLANE = 8


def _cdiv(a, b):
    return -(-a // b)


def _round_up(n, m):
    return _cdiv(n, m) * m


def _resident_spec(shape):
    """Constant-index (VMEM-resident) spec, single-buffered when supported."""
    idx_map = lambda i: (0,) * len(shape)
    try:
        return pl.BlockSpec(shape, idx_map, pipeline_mode=pl.Buffered(1))
    except (TypeError, AttributeError):
        # Older Pallas without per-BlockSpec pipeline_mode: still correct,
        # just double-buffers the (tiny) resident weights.
        return pl.BlockSpec(shape, idx_map)


def _autoencoder_kernel(
    x_ref,
    w_e1_ref, b_e1_ref,
    w_e2_ref, b_e2_ref,
    w_d1_ref, b_d1_ref,
    w_d2_ref, b_d2_ref,
    x_recon_ref, z_ref,
):
    x = x_ref[...]

    # ---- encoder: Linear -> ReLU -> Linear ----
    h = jnp.dot(x, w_e1_ref[...], preferred_element_type=jnp.float32) + b_e1_ref[...]
    h = jnp.maximum(h, 0.0)
    z = jnp.dot(h, w_e2_ref[...], preferred_element_type=jnp.float32) + b_e2_ref[...]

    # ---- decoder: Linear -> ReLU -> Linear ----
    d = jnp.dot(z, w_d1_ref[...], preferred_element_type=jnp.float32) + b_d1_ref[...]
    d = jnp.maximum(d, 0.0)
    x_recon = jnp.dot(d, w_d2_ref[...], preferred_element_type=jnp.float32) + b_d2_ref[...]

    x_recon_ref[...] = x_recon.astype(x_recon_ref.dtype)
    z_ref[...] = z.astype(z_ref.dtype)


@functools.partial(jax.jit, static_argnames=("tile_m",))
def view_specific_autoencoder(x, params, *, tile_m=1024):
    """Fused autoencoder forward. Returns (x_recon, z) with original shapes."""
    (w_e1, b_e1, w_e2, b_e2, w_d1, b_d1, w_d2, b_d2) = params
    batch, input_dim = x.shape
    hidden_dim = w_e1.shape[1]
    latent_dim = w_e2.shape[1]

    # Batch tile: minimize dead-row padding (<= 7 rows) while keeping tiles large
    # enough to amortize the ~0.35us per-grid-step overhead.
    n_tiles = max(1, _cdiv(batch, tile_m))
    tm = _round_up(_cdiv(batch, n_tiles), SUBLANE)
    m_pad = _round_up(batch, tm)
    grid = (m_pad // tm,)

    # Only pad the batch rows (and only when needed). Feature dims stay true-width.
    x_in = x if m_pad == batch else jnp.pad(x, ((0, m_pad - batch), (0, 0)))
    out_dtype = x.dtype

    # Activation tiles stream over the batch grid; params stay resident.
    act_spec = lambda cols: pl.BlockSpec((tm, cols), lambda i: (i, 0))

    flops = 2 * batch * (input_dim * hidden_dim + hidden_dim * latent_dim
                         + latent_dim * hidden_dim + hidden_dim * input_dim)
    param_bytes = sum(int(p.size) * p.dtype.itemsize
                      for p in (w_e1, b_e1, w_e2, b_e2, w_d1, b_d1, w_d2, b_d2))
    bytes_accessed = (int(x_in.dtype.itemsize) * m_pad * input_dim            # x read
                      + param_bytes                                           # params
                      + int(jnp.dtype(out_dtype).itemsize) * m_pad * (input_dim + latent_dim))

    x_recon_p, z_p = pl.pallas_call(
        _autoencoder_kernel,
        grid=grid,
        out_shape=(
            jax.ShapeDtypeStruct((m_pad, input_dim), out_dtype),
            jax.ShapeDtypeStruct((m_pad, latent_dim), out_dtype),
        ),
        in_specs=[
            act_spec(input_dim),
            _resident_spec((input_dim, hidden_dim)), _resident_spec((1, hidden_dim)),
            _resident_spec((hidden_dim, latent_dim)), _resident_spec((1, latent_dim)),
            _resident_spec((latent_dim, hidden_dim)), _resident_spec((1, hidden_dim)),
            _resident_spec((hidden_dim, input_dim)), _resident_spec((1, input_dim)),
        ],
        out_specs=(
            act_spec(input_dim),
            act_spec(latent_dim),
        ),
        compiler_params=pltpu.CompilerParams(
            dimension_semantics=("parallel",),
        ),
        cost_estimate=pl.CostEstimate(
            flops=int(flops), transcendentals=0, bytes_accessed=int(bytes_accessed)),
    )(x_in, w_e1, b_e1, w_e2, b_e2, w_d1, b_d1, w_d2, b_d2)

    if m_pad != batch:
        x_recon_p = x_recon_p[:batch]
        z_p = z_p[:batch]
    return x_recon_p, z_p


def init_params(key, input_dim, hidden_dim, latent_dim):
    """Deterministic synthetic init (weights as (in, out), biases as (1, out))."""
    ks = jax.random.split(key, 8)

    def lin(kw, kb, fan_in, fan_out):
        # mimic torch's uniform(-1/sqrt(fan_in), 1/sqrt(fan_in)) init
        bound = 1.0 / (fan_in ** 0.5)
        w = jax.random.uniform(kw, (fan_in, fan_out), jnp.float32, -bound, bound)
        b = jax.random.uniform(kb, (1, fan_out), jnp.float32, -bound, bound)
        return w, b

    w_e1, b_e1 = lin(ks[0], ks[1], input_dim, hidden_dim)
    w_e2, b_e2 = lin(ks[2], ks[3], hidden_dim, latent_dim)
    w_d1, b_d1 = lin(ks[4], ks[5], latent_dim, hidden_dim)
    w_d2, b_d2 = lin(ks[6], ks[7], hidden_dim, input_dim)
    return (w_e1, b_e1, w_e2, b_e2, w_d1, b_d1, w_d2, b_d2)


def _reference(x, params):
    (w_e1, b_e1, w_e2, b_e2, w_d1, b_d1, w_d2, b_d2) = params
    h = jnp.maximum(x @ w_e1 + b_e1, 0.0)
    z = h @ w_e2 + b_e2
    d = jnp.maximum(z @ w_d1 + b_d1, 0.0)
    x_recon = d @ w_d2 + b_d2
    return x_recon, z


if __name__ == "__main__":
    # Shapes consistent with the module's forward: x is (batch, input_dim).
    batch, input_dim, hidden_dim, latent_dim = 512, 64, 32, 16

    key = jax.random.PRNGKey(0)
    k_x, k_p = jax.random.split(key)
    x = jax.random.normal(k_x, (batch, input_dim), dtype=jnp.float32)
    params = init_params(k_p, input_dim, hidden_dim, latent_dim)

    x_recon_ref, z_ref = _reference(x, params)

    # Default (single large tile, zero padding for this batch).
    x_recon, z = view_specific_autoencoder(x, params)
    jax.block_until_ready((x_recon, z))
    assert x_recon.shape == (batch, input_dim) and z.shape == (batch, latent_dim)
    assert jnp.allclose(x_recon, x_recon_ref, atol=1e-5, rtol=1e-5)
    assert jnp.allclose(z, z_ref, atol=1e-5, rtol=1e-5)

    # Multi-step "parallel" grid: exercises resident-weight reuse across steps.
    xr_g, z_g = view_specific_autoencoder(x, params, tile_m=128)
    jax.block_until_ready((xr_g, z_g))
    assert jnp.allclose(xr_g, x_recon_ref, atol=1e-5, rtol=1e-5)
    assert jnp.allclose(z_g, z_ref, atol=1e-5, rtol=1e-5)

    # Non-8-aligned batch exercises the (only remaining) pad/slice path.
    x_small = x[:37]
    xr_s, z_s = view_specific_autoencoder(x_small, params)
    jax.block_until_ready((xr_s, z_s))
    xr_s_ref, z_s_ref = _reference(x_small, params)
    assert jnp.allclose(xr_s, xr_s_ref, atol=1e-5, rtol=1e-5)
    assert jnp.allclose(z_s, z_s_ref, atol=1e-5, rtol=1e-5)

    print("KERNEL_OK")
</pallas_src>

<mosaic_0001>
module attributes {stable_mosaic.version = 11 : i64} {
  func.func @_autoencoder_kernel(%arg0: i32, %arg1: memref<512x64xf32, #tpu.memory_space<vmem>>, %arg2: memref<64x32xf32, #tpu.memory_space<vmem>>, %arg3: memref<1x32xf32, #tpu.memory_space<vmem>>, %arg4: memref<32x16xf32, #tpu.memory_space<vmem>>, %arg5: memref<1x16xf32, #tpu.memory_space<vmem>>, %arg6: memref<16x32xf32, #tpu.memory_space<vmem>>, %arg7: memref<1x32xf32, #tpu.memory_space<vmem>>, %arg8: memref<32x64xf32, #tpu.memory_space<vmem>>, %arg9: memref<1x64xf32, #tpu.memory_space<vmem>>, %arg10: memref<512x64xf32, #tpu.memory_space<vmem>>, %arg11: memref<512x16xf32, #tpu.memory_space<vmem>>) attributes {dimension_semantics = [#tpu.dimension_semantics<parallel>], iteration_bounds = array<i64: 1>, scalar_prefetch = 0 : i64, scratch_operands = 0 : i64, tpu.core_type = #tpu.core_type<tc>, window_params = [{transform_indices = @transform_0, window_bounds = array<i64: 512, 64>}, {pipeline_mode = #tpu.pipeline_mode<synchronous>, transform_indices = @transform_1, window_bounds = array<i64: 64, 32>}, {pipeline_mode = #tpu.pipeline_mode<synchronous>, transform_indices = @transform_2, window_bounds = array<i64: 1, 32>}, {pipeline_mode = #tpu.pipeline_mode<synchronous>, transform_indices = @transform_3, window_bounds = array<i64: 32, 16>}, {pipeline_mode = #tpu.pipeline_mode<synchronous>, transform_indices = @transform_4, window_bounds = array<i64: 1, 16>}, {pipeline_mode = #tpu.pipeline_mode<synchronous>, transform_indices = @transform_5, window_bounds = array<i64: 16, 32>}, {pipeline_mode = #tpu.pipeline_mode<synchronous>, transform_indices = @transform_6, window_bounds = array<i64: 1, 32>}, {pipeline_mode = #tpu.pipeline_mode<synchronous>, transform_indices = @transform_7, window_bounds = array<i64: 32, 64>}, {pipeline_mode = #tpu.pipeline_mode<synchronous>, transform_indices = @transform_8, window_bounds = array<i64: 1, 64>}, {transform_indices = @transform_9, window_bounds = array<i64: 512, 64>}, {transform_indices = @transform_10, window_bounds = array<i64: 512, 16>}]} {
    %c0 = arith.constant 0 : index
    %c0_0 = arith.constant 0 : index
    %0 = vector.load %arg1[%c0, %c0_0] : memref<512x64xf32, #tpu.memory_space<vmem>>, vector<512x64xf32>
    %c0_1 = arith.constant 0 : index
    %c0_2 = arith.constant 0 : index
    %1 = vector.load %arg2[%c0_1, %c0_2] : memref<64x32xf32, #tpu.memory_space<vmem>>, vector<64x32xf32>
    %cst = arith.constant dense<0.000000e+00> : vector<512x32xf32>
    %2 = tpu.matmul %0, %1, %cst {dimension_numbers = #tpu.dot_dimension_numbers<[1], [0], [0], [1], [0, 0, 1, 1], [], []>} : vector<512x64xf32>, vector<64x32xf32>, vector<512x32xf32> -> vector<512x32xf32>
    %c0_3 = arith.constant 0 : index
    %c0_4 = arith.constant 0 : index
    %3 = vector.load %arg3[%c0_3, %c0_4] : memref<1x32xf32, #tpu.memory_space<vmem>>, vector<1x32xf32>
    %4 = vector.broadcast %3 : vector<1x32xf32> to vector<512x32xf32>
    %5 = arith.addf %2, %4 : vector<512x32xf32>
    %cst_5 = arith.constant 0.000000e+00 : f32
    %6 = vector.broadcast %cst_5 : f32 to vector<512x32xf32>
    %7 = arith.maximumf %5, %6 : vector<512x32xf32>
    %c0_6 = arith.constant 0 : index
    %c0_7 = arith.constant 0 : index
    %8 = vector.load %arg4[%c0_6, %c0_7] : memref<32x16xf32, #tpu.memory_space<vmem>>, vector<32x16xf32>
    %cst_8 = arith.constant dense<0.000000e+00> : vector<512x16xf32>
    %9 = tpu.matmul %7, %8, %cst_8 {dimension_numbers = #tpu.dot_dimension_numbers<[1], [0], [0], [1], [0, 0, 1, 1], [], []>} : vector<512x32xf32>, vector<32x16xf32>, vector<512x16xf32> -> vector<512x16xf32>
    %c0_9 = arith.constant 0 : index
    %c0_10 = arith.constant 0 : index
    %10 = vector.load %arg5[%c0_9, %c0_10] : memref<1x16xf32, #tpu.memory_space<vmem>>, vector<1x16xf32>
    %11 = vector.broadcast %10 : vector<1x16xf32> to vector<512x16xf32>
    %12 = arith.addf %9, %11 : vector<512x16xf32>
    %c0_11 = arith.constant 0 : index
    %c0_12 = arith.constant 0 : index
    %13 = vector.load %arg6[%c0_11, %c0_12] : memref<16x32xf32, #tpu.memory_space<vmem>>, vector<16x32xf32>
    %cst_13 = arith.constant dense<0.000000e+00> : vector<512x32xf32>
    %14 = tpu.matmul %12, %13, %cst_13 {dimension_numbers = #tpu.dot_dimension_numbers<[1], [0], [0], [1], [0, 0, 1, 1], [], []>} : vector<512x16xf32>, vector<16x32xf32>, vector<512x32xf32> -> vector<512x32xf32>
    %c0_14 = arith.constant 0 : index
    %c0_15 = arith.constant 0 : index
    %15 = vector.load %arg7[%c0_14, %c0_15] : memref<1x32xf32, #tpu.memory_space<vmem>>, vector<1x32xf32>
    %16 = vector.broadcast %15 : vector<1x32xf32> to vector<512x32xf32>
    %17 = arith.addf %14, %16 : vector<512x32xf32>
    %cst_16 = arith.constant 0.000000e+00 : f32
    %18 = vector.broadcast %cst_16 : f32 to vector<512x32xf32>
    %19 = arith.maximumf %17, %18 : vector<512x32xf32>
    %c0_17 = arith.constant 0 : index
    %c0_18 = arith.constant 0 : index
    %20 = vector.load %arg8[%c0_17, %c0_18] : memref<32x64xf32, #tpu.memory_space<vmem>>, vector<32x64xf32>
    %cst_19 = arith.constant dense<0.000000e+00> : vector<512x64xf32>
    %21 = tpu.matmul %19, %20, %cst_19 {dimension_numbers = #tpu.dot_dimension_numbers<[1], [0], [0], [1], [0, 0, 1, 1], [], []>} : vector<512x32xf32>, vector<32x64xf32>, vector<512x64xf32> -> vector<512x64xf32>
    %c0_20 = arith.constant 0 : index
    %c0_21 = arith.constant 0 : index
    %22 = vector.load %arg9[%c0_20, %c0_21] : memref<1x64xf32, #tpu.memory_space<vmem>>, vector<1x64xf32>
    %23 = vector.broadcast %22 : vector<1x64xf32> to vector<512x64xf32>
    %24 = arith.addf %21, %23 : vector<512x64xf32>
    %c0_22 = arith.constant 0 : index
    %c0_23 = arith.constant 0 : index
    %25 = vector.load %arg10[%c0_22, %c0_23] : memref<512x64xf32, #tpu.memory_space<vmem>>, vector<512x64xf32>
    tpu.vector_store %arg10[%c0_22, %c0_23], %24 {strides = array<i32>} : memref<512x64xf32, #tpu.memory_space<vmem>>, vector<512x64xf32>,
    %c0_24 = arith.constant 0 : index
    %c0_25 = arith.constant 0 : index
    %26 = vector.load %arg11[%c0_24, %c0_25] : memref<512x16xf32, #tpu.memory_space<vmem>>, vector<512x16xf32>
    tpu.vector_store %arg11[%c0_24, %c0_25], %12 {strides = array<i32>} : memref<512x16xf32, #tpu.memory_space<vmem>>, vector<512x16xf32>,
    return
  }
  func.func @transform_0(%arg0: i32) -> (i32, i32) {
    %c0_i32 = arith.constant 0 : i32
    %c0_i32_0 = arith.constant 0 : i32
    return %arg0, %c0_i32 : i32, i32
  }
  func.func @transform_1(%arg0: i32) -> (i32, i32) {
    %c0_i32 = arith.constant 0 : i32
    %c0_i32_0 = arith.constant 0 : i32
    %c0_i32_1 = arith.constant 0 : i32
    return %c0_i32, %c0_i32_0 : i32, i32
  }
  func.func @transform_2(%arg0: i32) -> (i32, i32) {
    %c0_i32 = arith.constant 0 : i32
    %c0_i32_0 = arith.constant 0 : i32
    %c0_i32_1 = arith.constant 0 : i32
    return %c0_i32, %c0_i32_0 : i32, i32
  }
  func.func @transform_3(%arg0: i32) -> (i32, i32) {
    %c0_i32 = arith.constant 0 : i32
    %c0_i32_0 = arith.constant 0 : i32
    %c0_i32_1 = arith.constant 0 : i32
    return %c0_i32, %c0_i32_0 : i32, i32
  }
  func.func @transform_4(%arg0: i32) -> (i32, i32) {
    %c0_i32 = arith.constant 0 : i32
    %c0_i32_0 = arith.constant 0 : i32
    %c0_i32_1 = arith.constant 0 : i32
    return %c0_i32, %c0_i32_0 : i32, i32
  }
  func.func @transform_5(%arg0: i32) -> (i32, i32) {
    %c0_i32 = arith.constant 0 : i32
    %c0_i32_0 = arith.constant 0 : i32
    %c0_i32_1 = arith.constant 0 : i32
    return %c0_i32, %c0_i32_0 : i32, i32
  }
  func.func @transform_6(%arg0: i32) -> (i32, i32) {
    %c0_i32 = arith.constant 0 : i32
    %c0_i32_0 = arith.constant 0 : i32
    %c0_i32_1 = arith.constant 0 : i32
    return %c0_i32, %c0_i32_0 : i32, i32
  }
  func.func @transform_7(%arg0: i32) -> (i32, i32) {
    %c0_i32 = arith.constant 0 : i32
    %c0_i32_0 = arith.constant 0 : i32
    %c0_i32_1 = arith.constant 0 : i32
    return %c0_i32, %c0_i32_0 : i32, i32
  }
  func.func @transform_8(%arg0: i32) -> (i32, i32) {
    %c0_i32 = arith.constant 0 : i32
    %c0_i32_0 = arith.constant 0 : i32
    %c0_i32_1 = arith.constant 0 : i32
    return %c0_i32, %c0_i32_0 : i32, i32
  }
  func.func @transform_9(%arg0: i32) -> (i32, i32) {
    %c0_i32 = arith.constant 0 : i32
    %c0_i32_0 = arith.constant 0 : i32
    return %arg0, %c0_i32 : i32, i32
  }
  func.func @transform_10(%arg0: i32) -> (i32, i32) {
    %c0_i32 = arith.constant 0 : i32
    %c0_i32_0 = arith.constant 0 : i32
    return %arg0, %c0_i32 : i32, i32
  }
}

</mosaic_0001>

<llo_original>
// kernel: view_specific_autoencoder.1
$region0: #{view_specific_autoencoder.1}
  #allocation0 [shape = 'u32[]', space=smem, size = 0x4, offset = 0x4, fixed_abs, tag = 'smem constant byte address 0x4 - core index']
  #allocation1 [shape = 'u32[144,128]{1,0:T(1,128)}', space=vmem, size = 0x12000, scoped, tag = 'internal scratch']
  %s0 = inlined_call_operand.vmem [shape: f32[512,64], index: 0, kind: input, shape index: {}]
  %s1 = inlined_call_operand.vmem [shape: f32[64,32], index: 1, kind: input, shape index: {}]
  %s2 = inlined_call_operand.vmem [shape: f32[1,32], index: 2, kind: input, shape index: {}]
  %s3 = inlined_call_operand.vmem [shape: f32[32,16], index: 3, kind: input, shape index: {}]
  %s4 = inlined_call_operand.vmem [shape: f32[1,16], index: 4, kind: input, shape index: {}]
  %s5 = inlined_call_operand.vmem [shape: f32[16,32], index: 5, kind: input, shape index: {}]
  %s6 = inlined_call_operand.vmem [shape: f32[1,32], index: 6, kind: input, shape index: {}]
  %s7 = inlined_call_operand.vmem [shape: f32[32,64], index: 7, kind: input, shape index: {}]
  %s8 = inlined_call_operand.vmem [shape: f32[1,64], index: 8, kind: input, shape index: {}]
  %s9 = inlined_call_operand.vmem [shape: f32[512,64], index: 9, kind: output, shape index: {0}]
  %s10 = inlined_call_operand.vmem [shape: f32[512,16], index: 10, kind: output, shape index: {1}]
  %11 = xla_tuple %s9, %s10
  %s12 = sld [smem:[#allocation0]]
  $region54: #{view_specific_autoencoder.1} parent=0
    _
  %s14 = ssub.s32 1, %s12
  %s15 = scalar_select 0, %s14, %s12
  // Predicated region
  $region2: #{view_specific_autoencoder.1} parent=0 // pred_check
    _
  $region3: #{view_specific_autoencoder.1} parent=0 // pred_check_branch
    %17 = sbr.rel (0) target = $region5
  $region4: #{view_specific_autoencoder.1} parent=0 // pred_region
    _
  $region5: #{view_specific_autoencoder.1} parent=0 // pred_fallthru
    _
  // Predicated region
  $region6: #{view_specific_autoencoder.1} parent=0 // pred_check
    _
  $region7: #{view_specific_autoencoder.1} parent=0 // pred_check_branch
    %19 = sbr.rel (0) target = $region9
  $region8: #{view_specific_autoencoder.1} parent=0 // pred_region
    _
  $region9: #{view_specific_autoencoder.1} parent=0 // pred_fallthru
    _
  // Predicated region
  $region10: #{view_specific_autoencoder.1} parent=0 // pred_check
    _
  $region11: #{view_specific_autoencoder.1} parent=0 // pred_check_branch
    %21 = sbr.rel (0) target = $region13
  $region12: #{view_specific_autoencoder.1} parent=0 // pred_region
    _
  $region13: #{view_specific_autoencoder.1} parent=0 // pred_fallthru
    _
  // Predicated region
  $region14: #{view_specific_autoencoder.1} parent=0 // pred_check
    _
  $region15: #{view_specific_autoencoder.1} parent=0 // pred_check_branch
    %23 = sbr.rel (0) target = $region17
  $region16: #{view_specific_autoencoder.1} parent=0 // pred_region
    _
  $region17: #{view_specific_autoencoder.1} parent=0 // pred_fallthru
    _
  // Predicated region
  $region18: #{view_specific_autoencoder.1} parent=0 // pred_check
    _
  $region19: #{view_specific_autoencoder.1} parent=0 // pred_check_branch
    %25 = sbr.rel (0) target = $region21
  $region20: #{view_specific_autoencoder.1} parent=0 // pred_region
    _
  $region21: #{view_specific_autoencoder.1} parent=0 // pred_fallthru
    _
  // Predicated region
  $region22: #{view_specific_autoencoder.1} parent=0 // pred_check
    _
  $region23: #{view_specific_autoencoder.1} parent=0 // pred_check_branch
    %27 = sbr.rel (0) target = $region25
  $region24: #{view_specific_autoencoder.1} parent=0 // pred_region
    _
  $region25: #{view_specific_autoencoder.1} parent=0 // pred_fallthru
    _
  // Predicated region
  $region26: #{view_specific_autoencoder.1} parent=0 // pred_check
    _
  $region27: #{view_specific_autoencoder.1} parent=0 // pred_check_branch
    %29 = sbr.rel (0) target = $region29
  $region28: #{view_specific_autoencoder.1} parent=0 // pred_region
    _
  $region29: #{view_specific_autoencoder.1} parent=0 // pred_fallthru
    _
  // Predicated region
  $region30: #{view_specific_autoencoder.1} parent=0 // pred_check
    _
  $region31: #{view_specific_autoencoder.1} parent=0 // pred_check_branch
    %31 = sbr.rel (0) target = $region33
  $region32: #{view_specific_autoencoder.1} parent=0 // pred_region
    _
  $region33: #{view_specific_autoencoder.1} parent=0 // pred_fallthru
    _
  // Predicated region
  $region34: #{view_specific_autoencoder.1} parent=0 // pred_check
    _
  $region35: #{view_specific_autoencoder.1} parent=0 // pred_check_branch
    %33 = sbr.rel (0) target = $region37
  $region36: #{view_specific_autoencoder.1} parent=0 // pred_region
    _
  $region37: #{view_specific_autoencoder.1} parent=0 // pred_fallthru
    _
  %v34 = vld [vmem:[%s0] sm:$0xff]
  %v35 = vld [vmem:[%s0 + $0x8] sm:$0xff]
  %v36 = vld [vmem:[%s0 + $0x10] sm:$0xff]
  %v37 = vld [vmem:[%s0 + $0x18] sm:$0xff]
  %v38 = vld [vmem:[%s0 + $0x20] sm:$0xff]
  %v39 = vld [vmem:[%s0 + $0x28] sm:$0xff]
  %v40 = vld [vmem:[%s0 + $0x30] sm:$0xff]
  %v41 = vld [vmem:[%s0 + $0x38] sm:$0xff]
  %v42 = vld [vmem:[%s0 + $0x40] sm:$0xff]
  %v43 = vld [vmem:[%s0 + $0x48] sm:$0xff]
  %v44 = vld [vmem:[%s0 + $0x50] sm:$0xff]
  %v45 = vld [vmem:[%s0 + $0x58] sm:$0xff]
  %v46 = vld [vmem:[%s0 + $0x60] sm:$0xff]
  %v47 = vld [vmem:[%s0 + $0x68] sm:$0xff]
  %v48 = vld [vmem:[%s0 + $0x70] sm:$0xff]
  %v49 = vld [vmem:[%s0 + $0x78] sm:$0xff]
  %v50 = vld [vmem:[%s0 + $0x80] sm:$0xff]
  %v51 = vld [vmem:[%s0 + $0x88] sm:$0xff]
  %v52 = vld [vmem:[%s0 + $0x90] sm:$0xff]
  %v53 = vld [vmem:[%s0 + $0x98] sm:$0xff]
  %v54 = vld [vmem:[%s0 + $0xa0] sm:$0xff]
  %v55 = vld [vmem:[%s0 + $0xa8] sm:$0xff]
  %v56 = vld [vmem:[%s0 + $0xb0] sm:$0xff]
  %v57 = vld [vmem:[%s0 + $0xb8] sm:$0xff]
  %v58 = vld [vmem:[%s0 + $0xc0] sm:$0xff]
  %v59 = vld [vmem:[%s0 + $0xc8] sm:$0xff]
  %v60 = vld [vmem:[%s0 + $0xd0] sm:$0xff]
  %v61 = vld [vmem:[%s0 + $0xd8] sm:$0xff]
  %v62 = vld [vmem:[%s0 + $0xe0] sm:$0xff]
  %v63 = vld [vmem:[%s0 + $0xe8] sm:$0xff]
  %v64 = vld [vmem:[%s0 + $0xf0] sm:$0xff]
  %v65 = vld [vmem:[%s0 + $0xf8] sm:$0xff]
  %v66 = vld [vmem:[%s0 + $0x100] sm:$0xff]
  %v67 = vld [vmem:[%s0 + $0x108] sm:$0xff]
  %v68 = vld [vmem:[%s0 + $0x110] sm:$0xff]
  %v69 = vld [vmem:[%s0 + $0x118] sm:$0xff]
  %v70 = vld [vmem:[%s0 + $0x120] sm:$0xff]
  %v71 = vld [vmem:[%s0 + $0x128] sm:$0xff]
  %v72 = vld [vmem:[%s0 + $0x130] sm:$0xff]
  %v73 = vld [vmem:[%s0 + $0x138] sm:$0xff]
  %v74 = vld [vmem:[%s0 + $0x140] sm:$0xff]
  %v75 = vld [vmem:[%s0 + $0x148] sm:$0xff]
  %v76 = vld [vmem:[%s0 + $0x150] sm:$0xff]
  %v77 = vld [vmem:[%s0 + $0x158] sm:$0xff]
  %v78 = vld [vmem:[%s0 + $0x160] sm:$0xff]
  %v79 = vld [vmem:[%s0 + $0x168] sm:$0xff]
  %v80 = vld [vmem:[%s0 + $0x170] sm:$0xff]
  %v81 = vld [vmem:[%s0 + $0x178] sm:$0xff]
  %v82 = vld [vmem:[%s0 + $0x180] sm:$0xff]
  %v83 = vld [vmem:[%s0 + $0x188] sm:$0xff]
  %v84 = vld [vmem:[%s0 + $0x190] sm:$0xff]
  %v85 = vld [vmem:[%s0 + $0x198] sm:$0xff]
  %v86 = vld [vmem:[%s0 + $0x1a0] sm:$0xff]
  %v87 = vld [vmem:[%s0 + $0x1a8] sm:$0xff]
  %v88 = vld [vmem:[%s0 + $0x1b0] sm:$0xff]
  %v89 = vld [vmem:[%s0 + $0x1b8] sm:$0xff]
  %v90 = vld [vmem:[%s0 + $0x1c0] sm:$0xff]
  %v91 = vld [vmem:[%s0 + $0x1c8] sm:$0xff]
  %v92 = vld [vmem:[%s0 + $0x1d0] sm:$0xff]
  %v93 = vld [vmem:[%s0 + $0x1d8] sm:$0xff]
  %v94 = vld [vmem:[%s0 + $0x1e0] sm:$0xff]
  %v95 = vld [vmem:[%s0 + $0x1e8] sm:$0xff]
  %v96 = vld [vmem:[%s0 + $0x1f0] sm:$0xff]
  %v97 = vld [vmem:[%s0 + $0x1f8] sm:$0xff]
  %v98 = vld [vmem:[%s1] sm:$0xff]
  %v99 = vld [vmem:[%s1 + $0x8] sm:$0xff]
  %v100 = vld [vmem:[%s1 + $0x10] sm:$0xff]
  %v101 = vld [vmem:[%s1 + $0x18] sm:$0xff]
  %v102 = vld [vmem:[%s1 + $0x20] sm:$0xff]
  %v103 = vld [vmem:[%s1 + $0x28] sm:$0xff]
  %v104 = vld [vmem:[%s1 + $0x30] sm:$0xff]
  %v105 = vld [vmem:[%s1 + $0x38] sm:$0xff]
  %v106 = vld [vmem:[%s2] sm:$0x1]
  %v108 = vlaneseq
  %v109 = vshrl.u32 %v108, 7
  %v110 = vsub.s32 0, %v109
  %v111 = vrot.slane %v106, %v110
  %vm113 = vcmask 523264
  %v115 = vsel %vm113, %v34, 0
  %v118 = vsel %vm113, %v35, 0
  %v121 = vsel %vm113, %v36, 0
  %v124 = vsel %vm113, %v37, 0
  %v127 = vsel %vm113, %v38, 0
  %v130 = vsel %vm113, %v39, 0
  %v133 = vsel %vm113, %v40, 0
  %v136 = vsel %vm113, %v41, 0
  %v139 = vsel %vm113, %v42, 0
  %v142 = vsel %vm113, %v43, 0
  %v145 = vsel %vm113, %v44, 0
  %v148 = vsel %vm113, %v45, 0
  %v151 = vsel %vm113, %v46, 0
  %v154 = vsel %vm113, %v47, 0
  %v157 = vsel %vm113, %v48, 0
  %v160 = vsel %vm113, %v49, 0
  %v163 = vsel %vm113, %v50, 0
  %v166 = vsel %vm113, %v51, 0
  %v169 = vsel %vm113, %v52, 0
  %v172 = vsel %vm113, %v53, 0
  %v175 = vsel %vm113, %v54, 0
  %v178 = vsel %vm113, %v55, 0
  %v181 = vsel %vm113, %v56, 0
  %v184 = vsel %vm113, %v57, 0
  %v187 = vsel %vm113, %v58, 0
  %v190 = vsel %vm113, %v59, 0
  %v193 = vsel %vm113, %v60, 0
  %v196 = vsel %vm113, %v61, 0
  %v199 = vsel %vm113, %v62, 0
  %v202 = vsel %vm113, %v63, 0
  %v205 = vsel %vm113, %v64, 0
  %v208 = vsel %vm113, %v65, 0
  %v211 = vsel %vm113, %v66, 0
  %v214 = vsel %vm113, %v67, 0
  %v217 = vsel %vm113, %v68, 0
  %v220 = vsel %vm113, %v69, 0
  %v223 = vsel %vm113, %v70, 0
  %v226 = vsel %vm113, %v71, 0
  %v229 = vsel %vm113, %v72, 0
  %v232 = vsel %vm113, %v73, 0
  %v235 = vsel %vm113, %v74, 0
  %v238 = vsel %vm113, %v75, 0
  %v241 = vsel %vm113, %v76, 0
  %v244 = vsel %vm113, %v77, 0
  %v247 = vsel %vm113, %v78, 0
  %v250 = vsel %vm113, %v79, 0
  %v253 = vsel %vm113, %v80, 0
  %v256 = vsel %vm113, %v81, 0
  %v259 = vsel %vm113, %v82, 0
  %v262 = vsel %vm113, %v83, 0
  %v265 = vsel %vm113, %v84, 0
  %v268 = vsel %vm113, %v85, 0
  %v271 = vsel %vm113, %v86, 0
  %v274 = vsel %vm113, %v87, 0
  %v277 = vsel %vm113, %v88, 0
  %v280 = vsel %vm113, %v89, 0
  %v283 = vsel %vm113, %v90, 0
  %v286 = vsel %vm113, %v91, 0
  %v289 = vsel %vm113, %v92, 0
  %v292 = vsel %vm113, %v93, 0
  %v295 = vsel %vm113, %v94, 0
  %v298 = vsel %vm113, %v95, 0
  %v301 = vsel %vm113, %v96, 0
  %v304 = vsel %vm113, %v97, 0
  %306 = vmatprep.subr.mxu0 0.0
  %307 = vmatpush1.msra.mxu0 %v98
  %308 = vmatprep.subr.mxu0 0.0
  %309 = vmatpush1.msra.mxu0 %v99
  %310 = vmatprep.subr.mxu0 0.0
  %311 = vmatpush1.msra.mxu0 %v100
  %312 = vmatprep.subr.mxu0 0.0
  %313 = vmatpush1.msra.mxu0 %v101
  %314 = vmatprep.subr.mxu0 0.0
  %315 = vmatpush1.msra.mxu0 %v102
  %316 = vmatprep.subr.mxu0 0.0
  %317 = vmatpush1.msra.mxu0 %v103
  %318 = vmatprep.subr.mxu0 0.0
  %319 = vmatpush1.msra.mxu0 %v104
  %320 = vmatprep.subr.mxu0 0.0
  %321 = vmatpush1.msra.mxu0 %v105
  %322 = vmatprep.subr.mxu0 0.0
  %323 = vmatpush1.msra.mxu0 0.0
  %324 = vmatprep.subr.mxu0 0.0
  %325 = vmatpush1.msra.mxu0 0.0
  %326 = vmatprep.subr.mxu0 0.0
  %327 = vmatpush1.msra.mxu0 0.0
  %328 = vmatprep.subr.mxu0 0.0
  %329 = vmatpush1.msra.mxu0 0.0
  %330 = vmatprep.subr.mxu0 0.0
  %331 = vmatpush1.msra.mxu0 0.0
  %332 = vmatprep.subr.mxu0 0.0
  %333 = vmatpush1.msra.mxu0 0.0
  %334 = vmatprep.subr.mxu0 0.0
  %335 = vmatpush1.msra.mxu0 0.0
  %336 = vmatprep.subr.mxu0 0.0
  %337 = vmatpush1.msra.mxu0 0.0
  %338 = vmatprep.subr.mxu0 0.0
  %339 = vmatpush1.msra.mxu0 0.0
  %340 = vmatprep.subr.mxu0 0.0
  %341 = vmatpush1.msra.mxu0 0.0
  %342 = vmatprep.subr.mxu0 0.0
  %343 = vmatpush1.msra.mxu0 0.0
  %344 = vmatprep.subr.mxu0 0.0
  %345 = vmatpush1.msra.mxu0 0.0
  %346 = vmatprep.subr.mxu0 0.0
  %347 = vmatpush1.msra.mxu0 0.0
  %348 = vmatprep.subr.mxu0 0.0
  %349 = vmatpush1.msra.mxu0 0.0
  %350 = vmatprep.subr.mxu0 0.0
  %351 = vmatpush1.msra.mxu0 0.0
  %352 = vmatprep.subr.mxu0 0.0
  %353 = vmatpush1.msra.mxu0 0.0
  %354 = vmatprep.subr.mxu0 0.0
  %355 = vmatpush1.msra.mxu0 0.0
  %356 = vmatprep.subr.mxu0 0.0
  %357 = vmatpush1.msra.mxu0 0.0
  %358 = vmatprep.subr.mxu0 0.0
  %359 = vmatpush1.msra.mxu0 0.0
  %360 = vmatprep.subr.mxu0 0.0
  %361 = vmatpush1.msra.mxu0 0.0
  %362 = vmatprep.subr.mxu0 0.0
  %363 = vmatpush1.msra.mxu0 0.0
  %364 = vmatprep.subr.mxu0 0.0
  %365 = vmatpush1.msra.mxu0 0.0
  %366 = vmatprep.subr.mxu0 0.0
  %367 = vmatpush1.msra.mxu0 0.0
  %368 = vmatprep.subr.mxu0 0.0
  %369 = vmatpush1.msra.mxu0 0.0
  %370 = vmatprep.mubr.f32.mxu0 0.0
  %371 = vmatmul.mubr.f32.gmra.mrb[0].mxu0 %v115
  %v372 = vpop.f32.mrb[0].mxu0
  %v373 = vadd.f32 %v111, %v372
  %v374 = vpop.f32.mrb[0].mxu0
  %375 = vmatprep.mubr.f32.mxu0 0.0
  %376 = vmatmul.mubr.f32.gmra.mrb[0].mxu0 %v118
  %v377 = vpop.f32.mrb[0].mxu0
  %v378 = vadd.f32 %v111, %v377
  %v379 = vpop.f32.mrb[0].mxu0
  %380 = vmatprep.mubr.f32.mxu0 0.0
  %381 = vmatmul.mubr.f32.gmra.mrb[0].mxu0 %v121
  %v382 = vpop.f32.mrb[0].mxu0
  %v383 = vadd.f32 %v111, %v382
  %v384 = vpop.f32.mrb[0].mxu0
  %385 = vmatprep.mubr.f32.mxu0 0.0
  %386 = vmatmul.mubr.f32.gmra.mrb[0].mxu0 %v124
  %v387 = vpop.f32.mrb[0].mxu0
  %v388 = vadd.f32 %v111, %v387
  %v389 = vpop.f32.mrb[0].mxu0
  %390 = vmatprep.mubr.f32.mxu0 0.0
  %391 = vmatmul.mubr.f32.gmra.mrb[0].mxu0 %v127
  %v392 = vpop.f32.mrb[0].mxu0
  %v393 = vadd.f32 %v111, %v392
  %v394 = vpop.f32.mrb[0].mxu0
  %395 = vmatprep.mubr.f32.mxu0 0.0
  %396 = vmatmul.mubr.f32.gmra.mrb[0].mxu0 %v130
  %v397 = vpop.f32.mrb[0].mxu0
  %v398 = vadd.f32 %v111, %v397
  %v399 = vpop.f32.mrb[0].mxu0
  %400 = vmatprep.mubr.f32.mxu0 0.0
  %401 = vmatmul.mubr.f32.gmra.mrb[0].mxu0 %v133
  %v402 = vpop.f32.mrb[0].mxu0
  %v403 = vadd.f32 %v111, %v402
  %v404 = vpop.f32.mrb[0].mxu0
  %405 = vmatprep.mubr.f32.mxu0 0.0
  %406 = vmatmul.mubr.f32.gmra.mrb[0].mxu0 %v136
  %v407 = vpop.f32.mrb[0].mxu0
  %v408 = vadd.f32 %v111, %v407
  %v409 = vpop.f32.mrb[0].mxu0
  %410 = vmatprep.mubr.f32.mxu0 0.0
  %411 = vmatmul.mubr.f32.gmra.mrb[0].mxu0 %v139
  %v412 = vpop.f32.mrb[0].mxu0
  %v413 = vadd.f32 %v111, %v412
  %v414 = vpop.f32.mrb[0].mxu0
  %415 = vmatprep.mubr.f32.mxu0 0.0
  %416 = vmatmul.mubr.f32.gmra.mrb[0].mxu0 %v142
  %v417 = vpop.f32.mrb[0].mxu0
  %v418 = vadd.f32 %v111, %v417
  %v419 = vpop.f32.mrb[0].mxu0
  %420 = vmatprep.mubr.f32.mxu0 0.0
  %421 = vmatmul.mubr.f32.gmra.mrb[0].mxu0 %v145
  %v422 = vpop.f32.mrb[0].mxu0
  %v423 = vadd.f32 %v111, %v422
  %v424 = vpop.f32.mrb[0].mxu0
  %425 = vmatprep.mubr.f32.mxu0 0.0
  %426 = vmatmul.mubr.f32.gmra.mrb[0].mxu0 %v148
  %v427 = vpop.f32.mrb[0].mxu0
  %v428 = vadd.f32 %v111, %v427
  %v429 = vpop.f32.mrb[0].mxu0
  %430 = vmatprep.mubr.f32.mxu0 0.0
  %431 = vmatmul.mubr.f32.gmra.mrb[0].mxu0 %v151
  %v432 = vpop.f32.mrb[0].mxu0
  %v433 = vadd.f32 %v111, %v432
  %v434 = vpop.f32.mrb[0].mxu0
  %435 = vmatprep.mubr.f32.mxu0 0.0
  %436 = vmatmul.mubr.f32.gmra.mrb[0].mxu0 %v154
  %v437 = vpop.f32.mrb[0].mxu0
  %v438 = vadd.f32 %v111, %v437
  %v439 = vpop.f32.mrb[0].mxu0
  %440 = vmatprep.mubr.f32.mxu0 0.0
  %441 = vmatmul.mubr.f32.gmra.mrb[0].mxu0 %v157
  %v442 = vpop.f32.mrb[0].mxu0
  %v443 = vadd.f32 %v111, %v442
  %v444 = vpop.f32.mrb[0].mxu0
  %445 = vmatprep.mubr.f32.mxu0 0.0
  %446 = vmatmul.mubr.f32.gmra.mrb[0].mxu0 %v160
  %v447 = vpop.f32.mrb[0].mxu0
  %v448 = vadd.f32 %v111, %v447
  %v449 = vpop.f32.mrb[0].mxu0
  %450 = vmatprep.mubr.f32.mxu0 0.0
  %451 = vmatmul.mubr.f32.gmra.mrb[0].mxu0 %v163
  %v452 = vpop.f32.mrb[0].mxu0
  %v453 = vadd.f32 %v111, %v452
  %v454 = vpop.f32.mrb[0].mxu0
  %455 = vmatprep.mubr.f32.mxu0 0.0
  %456 = vmatmul.mubr.f32.gmra.mrb[0].mxu0 %v166
  %v457 = vpop.f32.mrb[0].mxu0
  %v458 = vadd.f32 %v111, %v457
  %v459 = vpop.f32.mrb[0].mxu0
  %460 = vmatprep.mubr.f32.mxu0 0.0
  %461 = vmatmul.mubr.f32.gmra.mrb[0].mxu0 %v169
  %v462 = vpop.f32.mrb[0].mxu0
  %v463 = vadd.f32 %v111, %v462
  %v464 = vpop.f32.mrb[0].mxu0
  %465 = vmatprep.mubr.f32.mxu0 0.0
  %466 = vmatmul.mubr.f32.gmra.mrb[0].mxu0 %v172
  %v467 = vpop.f32.mrb[0].mxu0
  %v468 = vadd.f32 %v111, %v467
  %v469 = vpop.f32.mrb[0].mxu0
  %470 = vmatprep.mubr.f32.mxu0 0.0
  %471 = vmatmul.mubr.f32.gmra.mrb[0].mxu0 %v175
  %v472 = vpop.f32.mrb[0].mxu0
  %v473 = vadd.f32 %v111, %v472
  %v474 = vpop.f32.mrb[0].mxu0
  %475 = vmatprep.mubr.f32.mxu0 0.0
  %476 = vmatmul.mubr.f32.gmra.mrb[0].mxu0 %v178
  %v477 = vpop.f32.mrb[0].mxu0
  %v478 = vadd.f32 %v111, %v477
  %v479 = vpop.f32.mrb[0].mxu0
  %480 = vmatprep.mubr.f32.mxu0 0.0
  %481 = vmatmul.mubr.f32.gmra.mrb[0].mxu0 %v181
  %v482 = vpop.f32.mrb[0].mxu0
  %v483 = vadd.f32 %v111, %v482
  %v484 = vpop.f32.mrb[0].mxu0
  %485 = vmatprep.mubr.f32.mxu0 0.0
  %486 = vmatmul.mubr.f32.gmra.mrb[0].mxu0 %v184
  %v487 = vpop.f32.mrb[0].mxu0
  %v488 = vadd.f32 %v111, %v487
  %v489 = vpop.f32.mrb[0].mxu0
  %490 = vmatprep.mubr.f32.mxu0 0.0
  %491 = vmatmul.mubr.f32.gmra.mrb[0].mxu0 %v187
  %v492 = vpop.f32.mrb[0].mxu0
  %v493 = vadd.f32 %v111, %v492
  %v494 = vpop.f32.mrb[0].mxu0
  %495 = vmatprep.mubr.f32.mxu0 0.0
  %496 = vmatmul.mubr.f32.gmra.mrb[0].mxu0 %v190
  %v497 = vpop.f32.mrb[0].mxu0
  %v498 = vadd.f32 %v111, %v497
  %v499 = vpop.f32.mrb[0].mxu0
  %500 = vmatprep.mubr.f32.mxu0 0.0
  %501 = vmatmul.mubr.f32.gmra.mrb[0].mxu0 %v193
  %v502 = vpop.f32.mrb[0].mxu0
  %v503 = vadd.f32 %v111, %v502
  %v504 = vpop.f32.mrb[0].mxu0
  %505 = vmatprep.mubr.f32.mxu0 0.0
  %506 = vmatmul.mubr.f32.gmra.mrb[0].mxu0 %v196
  %v507 = vpop.f32.mrb[0].mxu0
  %v508 = vadd.f32 %v111, %v507
  %v509 = vpop.f32.mrb[0].mxu0
  %510 = vmatprep.mubr.f32.mxu0 0.0
  %511 = vmatmul.mubr.f32.gmra.mrb[0].mxu0 %v199
  %v512 = vpop.f32.mrb[0].mxu0
  %v513 = vadd.f32 %v111, %v512
  %v514 = vpop.f32.mrb[0].mxu0
  %515 = vmatprep.mubr.f32.mxu0 0.0
  %516 = vmatmul.mubr.f32.gmra.mrb[0].mxu0 %v202
  %v517 = vpop.f32.mrb[0].mxu0
  %v518 = vadd.f32 %v111, %v517
  %v519 = vpop.f32.mrb[0].mxu0
  %520 = vmatprep.mubr.f32.mxu0 0.0
  %521 = vmatmul.mubr.f32.gmra.mrb[0].mxu0 %v205
  %v522 = vpop.f32.mrb[0].mxu0
  %v523 = vadd.f32 %v111, %v522
  %v524 = vpop.f32.mrb[0].mxu0
  %525 = vmatprep.mubr.f32.mxu0 0.0
  %526 = vmatmul.mubr.f32.gmra.mrb[0].mxu0 %v208
  %v527 = vpop.f32.mrb[0].mxu0
  %v528 = vadd.f32 %v111, %v527
  %v529 = vpop.f32.mrb[0].mxu0
  %530 = vmatprep.mubr.f32.mxu0 0.0
  %531 = vmatmul.mubr.f32.gmra.mrb[0].mxu0 %v211
  %v532 = vpop.f32.mrb[0].mxu0
  %v533 = vadd.f32 %v111, %v532
  %v534 = vpop.f32.mrb[0].mxu0
  %535 = vmatprep.mubr.f32.mxu0 0.0
  %536 = vmatmul.mubr.f32.gmra.mrb[0].mxu0 %v214
  %v537 = vpop.f32.mrb[0].mxu0
  %v538 = vadd.f32 %v111, %v537
  %v539 = vpop.f32.mrb[0].mxu0
  %540 = vmatprep.mubr.f32.mxu0 0.0
  %541 = vmatmul.mubr.f32.gmra.mrb[0].mxu0 %v217
  %v542 = vpop.f32.mrb[0].mxu0
  %v543 = vadd.f32 %v111, %v542
  %v544 = vpop.f32.mrb[0].mxu0
  %545 = vmatprep.mubr.f32.mxu0 0.0
  %546 = vmatmul.mubr.f32.gmra.mrb[0].mxu0 %v220
  %v547 = vpop.f32.mrb[0].mxu0
  %v548 = vadd.f32 %v111, %v547
  %v549 = vpop.f32.mrb[0].mxu0
  %550 = vmatprep.mubr.f32.mxu0 0.0
  %551 = vmatmul.mubr.f32.gmra.mrb[0].mxu0 %v223
  %v552 = vpop.f32.mrb[0].mxu0
  %v553 = vadd.f32 %v111, %v552
  %v554 = vpop.f32.mrb[0].mxu0
  %555 = vmatprep.mubr.f32.mxu0 0.0
  %556 = vmatmul.mubr.f32.gmra.mrb[0].mxu0 %v226
  %v557 = vpop.f32.mrb[0].mxu0
  %v558 = vadd.f32 %v111, %v557
  %v559 = vpop.f32.mrb[0].mxu0
  %560 = vmatprep.mubr.f32.mxu0 0.0
  %561 = vmatmul.mubr.f32.gmra.mrb[0].mxu0 %v229
  %v562 = vpop.f32.mrb[0].mxu0
  %v563 = vadd.f32 %v111, %v562
  %v564 = vpop.f32.mrb[0].mxu0
  %565 = vmatprep.mubr.f32.mxu0 0.0
  %566 = vmatmul.mubr.f32.gmra.mrb[0].mxu0 %v232
  %v567 = vpop.f32.mrb[0].mxu0
  %v568 = vadd.f32 %v111, %v567
  %v569 = vpop.f32.mrb[0].mxu0
  %570 = vmatprep.mubr.f32.mxu0 0.0
  %571 = vmatmul.mubr.f32.gmra.mrb[0].mxu0 %v235
  %v572 = vpop.f32.mrb[0].mxu0
  %v573 = vadd.f32 %v111, %v572
  %v574 = vpop.f32.mrb[0].mxu0
  %575 = vmatprep.mubr.f32.mxu0 0.0
  %576 = vmatmul.mubr.f32.gmra.mrb[0].mxu0 %v238
  %v577 = vpop.f32.mrb[0].mxu0
  %v578 = vadd.f32 %v111, %v577
  %v579 = vpop.f32.mrb[0].mxu0
  %580 = vmatprep.mubr.f32.mxu0 0.0
  %581 = vmatmul.mubr.f32.gmra.mrb[0].mxu0 %v241
  %v582 = vpop.f32.mrb[0].mxu0
  %v583 = vadd.f32 %v111, %v582
  %v584 = vpop.f32.mrb[0].mxu0
  %585 = vmatprep.mubr.f32.mxu0 0.0
  %586 = vmatmul.mubr.f32.gmra.mrb[0].mxu0 %v244
  %v587 = vpop.f32.mrb[0].mxu0
  %v588 = vadd.f32 %v111, %v587
  %v589 = vpop.f32.mrb[0].mxu0
  %590 = vmatprep.mubr.f32.mxu0 0.0
  %591 = vmatmul.mubr.f32.gmra.mrb[0].mxu0 %v247
  %v592 = vpop.f32.mrb[0].mxu0
  %v593 = vadd.f32 %v111, %v592
  %v594 = vpop.f32.mrb[0].mxu0
  %595 = vmatprep.mubr.f32.mxu0 0.0
  %596 = vmatmul.mubr.f32.gmra.mrb[0].mxu0 %v250
  %v597 = vpop.f32.mrb[0].mxu0
  %v598 = vadd.f32 %v111, %v597
  %v599 = vpop.f32.mrb[0].mxu0
  %600 = vmatprep.mubr.f32.mxu0 0.0
  %601 = vmatmul.mubr.f32.gmra.mrb[0].mxu0 %v253
  %v602 = vpop.f32.mrb[0].mxu0
  %v603 = vadd.f32 %v111, %v602
  %v604 = vpop.f32.mrb[0].mxu0
  %605 = vmatprep.mubr.f32.mxu0 0.0
  %606 = vmatmul.mubr.f32.gmra.mrb[0].mxu0 %v256
  %v607 = vpop.f32.mrb[0].mxu0
  %v608 = vadd.f32 %v111, %v607
  %v609 = vpop.f32.mrb[0].mxu0
  %610 = vmatprep.mubr.f32.mxu0 0.0
  %611 = vmatmul.mubr.f32.gmra.mrb[0].mxu0 %v259
  %v612 = vpop.f32.mrb[0].mxu0
  %v613 = vadd.f32 %v111, %v612
  %v614 = vpop.f32.mrb[0].mxu0
  %615 = vmatprep.mubr.f32.mxu0 0.0
  %616 = vmatmul.mubr.f32.gmra.mrb[0].mxu0 %v262
  %v617 = vpop.f32.mrb[0].mxu0
  %v618 = vadd.f32 %v111, %v617
  %v619 = vpop.f32.mrb[0].mxu0
  %620 = vmatprep.mubr.f32.mxu0 0.0
  %621 = vmatmul.mubr.f32.gmra.mrb[0].mxu0 %v265
  %v622 = vpop.f32.mrb[0].mxu0
  %v623 = vadd.f32 %v111, %v622
  %v624 = vpop.f32.mrb[0].mxu0
  %625 = vmatprep.mubr.f32.mxu0 0.0
  %626 = vmatmul.mubr.f32.gmra.mrb[0].mxu0 %v268
  %v627 = vpop.f32.mrb[0].mxu0
  %v628 = vadd.f32 %v111, %v627
  %v629 = vpop.f32.mrb[0].mxu0
  %630 = vmatprep.mubr.f32.mxu0 0.0
  %631 = vmatmul.mubr.f32.gmra.mrb[0].mxu0 %v271
  %v632 = vpop.f32.mrb[0].mxu0
  %v633 = vadd.f32 %v111, %v632
  %v634 = vpop.f32.mrb[0].mxu0
  %635 = vmatprep.mubr.f32.mxu0 0.0
  %636 = vmatmul.mubr.f32.gmra.mrb[0].mxu0 %v274
  %v637 = vpop.f32.mrb[0].mxu0
  %v638 = vadd.f32 %v111, %v637
  %v639 = vpop.f32.mrb[0].mxu0
  %640 = vmatprep.mubr.f32.mxu0 0.0
  %641 = vmatmul.mubr.f32.gmra.mrb[0].mxu0 %v277
  %v642 = vpop.f32.mrb[0].mxu0
  %v643 = vadd.f32 %v111, %v642
  %v644 = vpop.f32.mrb[0].mxu0
  %645 = vmatprep.mubr.f32.mxu0 0.0
  %646 = vmatmul.mubr.f32.gmra.mrb[0].mxu0 %v280
  %v647 = vpop.f32.mrb[0].mxu0
  %v648 = vadd.f32 %v111, %v647
  %v649 = vpop.f32.mrb[0].mxu0
  %650 = vmatprep.mubr.f32.mxu0 0.0
  %651 = vmatmul.mubr.f32.gmra.mrb[0].mxu0 %v283
  %v652 = vpop.f32.mrb[0].mxu0
  %v653 = vadd.f32 %v111, %v652
  %v654 = vpop.f32.mrb[0].mxu0
  %655 = vmatprep.mubr.f32.mxu0 0.0
  %656 = vmatmul.mubr.f32.gmra.mrb[0].mxu0 %v286
  %v657 = vpop.f32.mrb[0].mxu0
  %v658 = vadd.f32 %v111, %v657
  %v659 = vpop.f32.mrb[0].mxu0
  %660 = vmatprep.mubr.f32.mxu0 0.0
  %661 = vmatmul.mubr.f32.gmra.mrb[0].mxu0 %v289
  %v662 = vpop.f32.mrb[0].mxu0
  %v663 = vadd.f32 %v111, %v662
  %v664 = vpop.f32.mrb[0].mxu0
  %665 = vmatprep.mubr.f32.mxu0 0.0
  %666 = vmatmul.mubr.f32.gmra.mrb[0].mxu0 %v292
  %v667 = vpop.f32.mrb[0].mxu0
  %v668 = vadd.f32 %v111, %v667
  %v669 = vpop.f32.mrb[0].mxu0
  %670 = vmatprep.mubr.f32.mxu0 0.0
  %671 = vmatmul.mubr.f32.gmra.mrb[0].mxu0 %v295
  %v672 = vpop.f32.mrb[0].mxu0
  %v673 = vadd.f32 %v111, %v672
  %v674 = vpop.f32.mrb[0].mxu0
  %675 = vmatprep.mubr.f32.mxu0 0.0
  %676 = vmatmul.mubr.f32.gmra.mrb[0].mxu0 %v298
  %v677 = vpop.f32.mrb[0].mxu0
  %v678 = vadd.f32 %v111, %v677
  %v679 = vpop.f32.mrb[0].mxu0
  %680 = vmatprep.mubr.f32.mxu0 0.0
  %681 = vmatmul.mubr.f32.gmra.mrb[0].mxu0 %v301
  %v682 = vpop.f32.mrb[0].mxu0
  %v683 = vadd.f32 %v111, %v682
  %v684 = vpop.f32.mrb[0].mxu0
  %685 = vmatprep.mubr.f32.mxu0 0.0
  %686 = vmatmul.mubr.f32.gmra.mrb[0].mxu0 %v304
  %v687 = vpop.f32.mrb[0].mxu0
  %v688 = vadd.f32 %v111, %v687
  %v689 = vpop.f32.mrb[0].mxu0
  %690 = vdwg.mxu0
  %v691 = vmax.f32 %v373, 0.0
  %v692 = vmax.f32 %v378, 0.0
  %v693 = vmax.f32 %v383, 0.0
  %v694 = vmax.f32 %v388, 0.0
  %v695 = vmax.f32 %v393, 0.0
  %v696 = vmax.f32 %v398, 0.0
  %v697 = vmax.f32 %v403, 0.0
  %v698 = vmax.f32 %v408, 0.0
  %v699 = vmax.f32 %v413, 0.0
  %v700 = vmax.f32 %v418, 0.0
  %v701 = vmax.f32 %v423, 0.0
  %v702 = vmax.f32 %v428, 0.0
  %v703 = vmax.f32 %v433, 0.0
  %v704 = vmax.f32 %v438, 0.0
  %v705 = vmax.f32 %v443, 0.0
  %v706 = vmax.f32 %v448, 0.0
  %v707 = vmax.f32 %v453, 0.0
  %v708 = vmax.f32 %v458, 0.0
  %v709 = vmax.f32 %v463, 0.0
  %v710 = vmax.f32 %v468, 0.0
  %v711 = vmax.f32 %v473, 0.0
  %v712 = vmax.f32 %v478, 0.0
  %v713 = vmax.f32 %v483, 0.0
  %v714 = vmax.f32 %v488, 0.0
  %v715 = vmax.f32 %v493, 0.0
  %v716 = vmax.f32 %v498, 0.0
  %v717 = vmax.f32 %v503, 0.0
  %v718 = vmax.f32 %v508, 0.0
  %v719 = vmax.f32 %v513, 0.0
  %v720 = vmax.f32 %v518, 0.0
  %v721 = vmax.f32 %v523, 0.0
  %v722 = vmax.f32 %v528, 0.0
  %v723 = vmax.f32 %v533, 0.0
  %v724 = vmax.f32 %v538, 0.0
  %v725 = vmax.f32 %v543, 0.0
  %v726 = vmax.f32 %v548, 0.0
  %v727 = vmax.f32 %v553, 0.0
  %v728 = vmax.f32 %v558, 0.0
  %v729 = vmax.f32 %v563, 0.0
  %v730 = vmax.f32 %v568, 0.0
  %v731 = vmax.f32 %v573, 0.0
  %v732 = vmax.f32 %v578, 0.0
  %v733 = vmax.f32 %v583, 0.0
  %v734 = vmax.f32 %v588, 0.0
  %v735 = vmax.f32 %v593, 0.0
  %v736 = vmax.f32 %v598, 0.0
  %v737 = vmax.f32 %v603, 0.0
  %v738 = vmax.f32 %v608, 0.0
  %v739 = vmax.f32 %v613, 0.0
  %v740 = vmax.f32 %v618, 0.0
  %v741 = vmax.f32 %v623, 0.0
  %v742 = vmax.f32 %v628, 0.0
  %v743 = vmax.f32 %v633, 0.0
  %v744 = vmax.f32 %v638, 0.0
  %v745 = vmax.f32 %v643, 0.0
  %v746 = vmax.f32 %v648, 0.0
  %v747 = vmax.f32 %v653, 0.0
  %v748 = vmax.f32 %v658, 0.0
  %v749 = vmax.f32 %v663, 0.0
  %v750 = vmax.f32 %v668, 0.0
  %v751 = vmax.f32 %v673, 0.0
  %v752 = vmax.f32 %v678, 0.0
  %v753 = vmax.f32 %v683, 0.0
  %v754 = vmax.f32 %v688, 0.0
  %v755 = vld [vmem:[%s3] sm:$0xff]
  %v756 = vld [vmem:[%s3 + $0x8] sm:$0xff]
  %v757 = vld [vmem:[%s3 + $0x10] sm:$0xff]
  %v758 = vld [vmem:[%s3 + $0x18] sm:$0xff]
  %v759 = vld [vmem:[%s4] sm:$0x1]
  %v761 = vlaneseq
  %v762 = vshrl.u32 %v761, 7
  %v763 = vsub.s32 0, %v762
  %v764 = vrot.slane %v759, %v763
  %vm766 = vcmask 261120
  %v768 = vsel %vm766, %v691, 0
  %v771 = vsel %vm766, %v692, 0
  %v774 = vsel %vm766, %v693, 0
  %v777 = vsel %vm766, %v694, 0
  %v780 = vsel %vm766, %v695, 0
  %v783 = vsel %vm766, %v696, 0
  %v786 = vsel %vm766, %v697, 0
  %v789 = vsel %vm766, %v698, 0
  %v792 = vsel %vm766, %v699, 0
  %v795 = vsel %vm766, %v700, 0
  %v798 = vsel %vm766, %v701, 0
  %v801 = vsel %vm766, %v702, 0
  %v804 = vsel %vm766, %v703, 0
  %v807 = vsel %vm766, %v704, 0
  %v810 = vsel %vm766, %v705, 0
  %v813 = vsel %vm766, %v706, 0
  %v816 = vsel %vm766, %v707, 0
  %v819 = vsel %vm766, %v708, 0
  %v822 = vsel %vm766, %v709, 0
  %v825 = vsel %vm766, %v710, 0
  %v828 = vsel %vm766, %v711, 0
  %v831 = vsel %vm766, %v712, 0
  %v834 = vsel %vm766, %v713, 0
  %v837 = vsel %vm766, %v714, 0
  %v840 = vsel %vm766, %v715, 0
  %v843 = vsel %vm766, %v716, 0
  %v846 = vsel %vm766, %v717, 0
  %v849 = vsel %vm766, %v718, 0
  %v852 = vsel %vm766, %v719, 0
  %v855 = vsel %vm766, %v720, 0
  %v858 = vsel %vm766, %v721, 0
  %v861 = vsel %vm766, %v722, 0
  %v864 = vsel %vm766, %v723, 0
  %v867 = vsel %vm766, %v724, 0
  %v870 = vsel %vm766, %v725, 0
  %v873 = vsel %vm766, %v726, 0
  %v876 = vsel %vm766, %v727, 0
  %v879 = vsel %vm766, %v728, 0
  %v882 = vsel %vm766, %v729, 0
  %v885 = vsel %vm766, %v730, 0
  %v888 = vsel %vm766, %v731, 0
  %v891 = vsel %vm766, %v732, 0
  %v894 = vsel %vm766, %v733, 0
  %v897 = vsel %vm766, %v734, 0
  %v900 = vsel %vm766, %v735, 0
  %v903 = vsel %vm766, %v736, 0
  %v906 = vsel %vm766, %v737, 0
  %v909 = vsel %vm766, %v738, 0
  %v912 = vsel %vm766, %v739, 0
  %v915 = vsel %vm766, %v740, 0
  %v918 = vsel %vm766, %v741, 0
  %v921 = vsel %vm766, %v742, 0
  %v924 = vsel %vm766, %v743, 0
  %v927 = vsel %vm766, %v744, 0
  %v930 = vsel %vm766, %v745, 0
  %v933 = vsel %vm766, %v746, 0
  %v936 = vsel %vm766, %v747, 0
  %v939 = vsel %vm766, %v748, 0
  %v942 = vsel %vm766, %v749, 0
  %v945 = vsel %vm766, %v750, 0
  %v948 = vsel %vm766, %v751, 0
  %v951 = vsel %vm766, %v752, 0
  %v954 = vsel %vm766, %v753, 0
  %v957 = vsel %vm766, %v754, 0
  %959 = vmatprep.subr.mxu0 0.0
  %960 = vmatpush1.msra.mxu0 %v755
  %961 = vmatprep.subr.mxu0 0.0
  %962 = vmatpush1.msra.mxu0 %v756
  %963 = vmatprep.subr.mxu0 0.0
  %964 = vmatpush1.msra.mxu0 %v757
  %965 = vmatprep.subr.mxu0 0.0
  %966 = vmatpush1.msra.mxu0 %v758
  %967 = vmatprep.subr.mxu0 0.0
  %968 = vmatpush1.msra.mxu0 0.0
  %969 = vmatprep.subr.mxu0 0.0
  %970 = vmatpush1.msra.mxu0 0.0
  %971 = vmatprep.subr.mxu0 0.0
  %972 = vmatpush1.msra.mxu0 0.0
  %973 = vmatprep.subr.mxu0 0.0
  %974 = vmatpush1.msra.mxu0 0.0
  %975 = vmatprep.subr.mxu0 0.0
  %976 = vmatpush1.msra.mxu0 0.0
  %977 = vmatprep.subr.mxu0 0.0
  %978 = vmatpush1.msra.mxu0 0.0
  %979 = vmatprep.subr.mxu0 0.0
  %980 = vmatpush1.msra.mxu0 0.0
  %981 = vmatprep.subr.mxu0 0.0
  %982 = vmatpush1.msra.mxu0 0.0
  %983 = vmatprep.subr.mxu0 0.0
  %984 = vmatpush1.msra.mxu0 0.0
  %985 = vmatprep.subr.mxu0 0.0
  %986 = vmatpush1.msra.mxu0 0.0
  %987 = vmatprep.subr.mxu0 0.0
  %988 = vmatpush1.msra.mxu0 0.0
  %989 = vmatprep.subr.mxu0 0.0
  %990 = vmatpush1.msra.mxu0 0.0
  %991 = vmatprep.subr.mxu0 0.0
  %992 = vmatpush1.msra.mxu0 0.0
  %993 = vmatprep.subr.mxu0 0.0
  %994 = vmatpush1.msra.mxu0 0.0
  %995 = vmatprep.subr.mxu0 0.0
  %996 = vmatpush1.msra.mxu0 0.0
  %997 = vmatprep.subr.mxu0 0.0
  %998 = vmatpush1.msra.mxu0 0.0
  %999 = vmatprep.subr.mxu0 0.0
  %1000 = vmatpush1.msra.mxu0 0.0
  %1001 = vmatprep.subr.mxu0 0.0
  %1002 = vmatpush1.msra.mxu0 0.0
  %1003 = vmatprep.subr.mxu0 0.0
  %1004 = vmatpush1.msra.mxu0 0.0
  %1005 = vmatprep.subr.mxu0 0.0
  %1006 = vmatpush1.msra.mxu0 0.0
  %1007 = vmatprep.subr.mxu0 0.0
  %1008 = vmatpush1.msra.mxu0 0.0
  %1009 = vmatprep.subr.mxu0 0.0
  %1010 = vmatpush1.msra.mxu0 0.0
  %1011 = vmatprep.subr.mxu0 0.0
  %1012 = vmatpush1.msra.mxu0 0.0
  %1013 = vmatprep.subr.mxu0 0.0
  %1014 = vmatpush1.msra.mxu0 0.0
  %1015 = vmatprep.subr.mxu0 0.0
  %1016 = vmatpush1.msra.mxu0 0.0
  %1017 = vmatprep.subr.mxu0 0.0
  %1018 = vmatpush1.msra.mxu0 0.0
  %1019 = vmatprep.subr.mxu0 0.0
  %1020 = vmatpush1.msra.mxu0 0.0
  %1021 = vmatprep.subr.mxu0 0.0
  %1022 = vmatpush1.msra.mxu0 0.0
  %1023 = vmatprep.mubr.f32.mxu0 0.0
  %1024 = vmatmul.mubr.f32.gmra.mrb[0].mxu0 %v768
  %v1025 = vpop.f32.mrb[0].mxu0
  %v1026 = vadd.f32 %v764, %v1025
  %v1027 = vpop.f32.mrb[0].mxu0
  %1028 = vmatprep.mubr.f32.mxu0 0.0
  %1029 = vmatmul.mubr.f32.gmra.mrb[0].mxu0 %v771
  %v1030 = vpop.f32.mrb[0].mxu0
  %v1031 = vadd.f32 %v764, %v1030
  %v1032 = vpop.f32.mrb[0].mxu0
  %1033 = vmatprep.mubr.f32.mxu0 0.0
  %1034 = vmatmul.mubr.f32.gmra.mrb[0].mxu0 %v774
  %v1035 = vpop.f32.mrb[0].mxu0
  %v1036 = vadd.f32 %v764, %v1035
  %v1037 = vpop.f32.mrb[0].mxu0
  %1038 = vmatprep.mubr.f32.mxu0 0.0
  %1039 = vmatmul.mubr.f32.gmra.mrb[0].mxu0 %v777
  %v1040 = vpop.f32.mrb[0].mxu0
  %v1041 = vadd.f32 %v764, %v1040
  %v1042 = vpop.f32.mrb[0].mxu0
  %1043 = vmatprep.mubr.f32.mxu0 0.0
  %1044 = vmatmul.mubr.f32.gmra.mrb[0].mxu0 %v780
  %v1045 = vpop.f32.mrb[0].mxu0
  %v1046 = vadd.f32 %v764, %v1045
  %v1047 = vpop.f32.mrb[0].mxu0
  %1048 = vmatprep.mubr.f32.mxu0 0.0
  %1049 = vmatmul.mubr.f32.gmra.mrb[0].mxu0 %v783
  %v1050 = vpop.f32.mrb[0].mxu0
  %v1051 = vadd.f32 %v764, %v1050
  %v1052 = vpop.f32.mrb[0].mxu0
  %1053 = vmatprep.mubr.f32.mxu0 0.0
  %1054 = vmatmul.mubr.f32.gmra.mrb[0].mxu0 %v786
  %v1055 = vpop.f32.mrb[0].mxu0
  %v1056 = vadd.f32 %v764, %v1055
  %v1057 = vpop.f32.mrb[0].mxu0
  %1058 = vmatprep.mubr.f32.mxu0 0.0
  %1059 = vmatmul.mubr.f32.gmra.mrb[0].mxu0 %v789
  %v1060 = vpop.f32.mrb[0].mxu0
  %v1061 = vadd.f32 %v764, %v1060
  %v1062 = vpop.f32.mrb[0].mxu0
  %1063 = vmatprep.mubr.f32.mxu0 0.0
  %1064 = vmatmul.mubr.f32.gmra.mrb[0].mxu0 %v792
  %v1065 = vpop.f32.mrb[0].mxu0
  %v1066 = vadd.f32 %v764, %v1065
  %v1067 = vpop.f32.mrb[0].mxu0
  %1068 = vmatprep.mubr.f32.mxu0 0.0
  %1069 = vmatmul.mubr.f32.gmra.mrb[0].mxu0 %v795
  %v1070 = vpop.f32.mrb[0].mxu0
  %v1071 = vadd.f32 %v764, %v1070
  %v1072 = vpop.f32.mrb[0].mxu0
  %1073 = vmatprep.mubr.f32.mxu0 0.0
  %1074 = vmatmul.mubr.f32.gmra.mrb[0].mxu0 %v798
  %v1075 = vpop.f32.mrb[0].mxu0
  %v1076 = vadd.f32 %v764, %v1075
  %v1077 = vpop.f32.mrb[0].mxu0
  %1078 = vmatprep.mubr.f32.mxu0 0.0
  %1079 = vmatmul.mubr.f32.gmra.mrb[0].mxu0 %v801
  %v1080 = vpop.f32.mrb[0].mxu0
  %v1081 = vadd.f32 %v764, %v1080
  %v1082 = vpop.f32.mrb[0].mxu0
  %1083 = vmatprep.mubr.f32.mxu0 0.0
  %1084 = vmatmul.mubr.f32.gmra.mrb[0].mxu0 %v804
  %v1085 = vpop.f32.mrb[0].mxu0
  %v1086 = vadd.f32 %v764, %v1085
  %v1087 = vpop.f32.mrb[0].mxu0
  %1088 = vmatprep.mubr.f32.mxu0 0.0
  %1089 = vmatmul.mubr.f32.gmra.mrb[0].mxu0 %v807
  %v1090 = vpop.f32.mrb[0].mxu0
  %v1091 = vadd.f32 %v764, %v1090
  %v1092 = vpop.f32.mrb[0].mxu0
  %1093 = vmatprep.mubr.f32.mxu0 0.0
  %1094 = vmatmul.mubr.f32.gmra.mrb[0].mxu0 %v810
  %v1095 = vpop.f32.mrb[0].mxu0
  %v1096 = vadd.f32 %v764, %v1095
  %v1097 = vpop.f32.mrb[0].mxu0
  %1098 = vmatprep.mubr.f32.mxu0 0.0
  %1099 = vmatmul.mubr.f32.gmra.mrb[0].mxu0 %v813
  %v1100 = vpop.f32.mrb[0].mxu0
  %v1101 = vadd.f32 %v764, %v1100
  %v1102 = vpop.f32.mrb[0].mxu0
  %1103 = vmatprep.mubr.f32.mxu0 0.0
  %1104 = vmatmul.mubr.f32.gmra.mrb[0].mxu0 %v816
  %v1105 = vpop.f32.mrb[0].mxu0
  %v1106 = vadd.f32 %v764, %v1105
  %v1107 = vpop.f32.mrb[0].mxu0
  %1108 = vmatprep.mubr.f32.mxu0 0.0
  %1109 = vmatmul.mubr.f32.gmra.mrb[0].mxu0 %v819
  %v1110 = vpop.f32.mrb[0].mxu0
  %v1111 = vadd.f32 %v764, %v1110
  %v1112 = vpop.f32.mrb[0].mxu0
  %1113 = vmatprep.mubr.f32.mxu0 0.0
  %1114 = vmatmul.mubr.f32.gmra.mrb[0].mxu0 %v822
  %v1115 = vpop.f32.mrb[0].mxu0
  %v1116 = vadd.f32 %v764, %v1115
  %v1117 = vpop.f32.mrb[0].mxu0
  %1118 = vmatprep.mubr.f32.mxu0 0.0
  %1119 = vmatmul.mubr.f32.gmra.mrb[0].mxu0 %v825
  %v1120 = vpop.f32.mrb[0].mxu0
  %v1121 = vadd.f32 %v764, %v1120
  %v1122 = vpop.f32.mrb[0].mxu0
  %1123 = vmatprep.mubr.f32.mxu0 0.0
  %1124 = vmatmul.mubr.f32.gmra.mrb[0].mxu0 %v828
  %v1125 = vpop.f32.mrb[0].mxu0
  %v1126 = vadd.f32 %v764, %v1125
  %v1127 = vpop.f32.mrb[0].mxu0
  %1128 = vmatprep.mubr.f32.mxu0 0.0
  %1129 = vmatmul.mubr.f32.gmra.mrb[0].mxu0 %v831
  %v1130 = vpop.f32.mrb[0].mxu0
  %v1131 = vadd.f32 %v764, %v1130
  %v1132 = vpop.f32.mrb[0].mxu0
  %1133 = vmatprep.mubr.f32.mxu0 0.0
  %1134 = vmatmul.mubr.f32.gmra.mrb[0].mxu0 %v834
  %v1135 = vpop.f32.mrb[0].mxu0
  %v1136 = vadd.f32 %v764, %v1135
  %v1137 = vpop.f32.mrb[0].mxu0
  %1138 = vmatprep.mubr.f32.mxu0 0.0
  %1139 = vmatmul.mubr.f32.gmra.mrb[0].mxu0 %v837
  %v1140 = vpop.f32.mrb[0].mxu0
  %v1141 = vadd.f32 %v764, %v1140
  %v1142 = vpop.f32.mrb[0].mxu0
  %1143 = vmatprep.mubr.f32.mxu0 0.0
  %1144 = vmatmul.mubr.f32.gmra.mrb[0].mxu0 %v840
  %v1145 = vpop.f32.mrb[0].mxu0
  %v1146 = vadd.f32 %v764, %v1145
  %v1147 = vpop.f32.mrb[0].mxu0
  %1148 = vmatprep.mubr.f32.mxu0 0.0
  %1149 = vmatmul.mubr.f32.gmra.mrb[0].mxu0 %v843
  %v1150 = vpop.f32.mrb[0].mxu0
  %v1151 = vadd.f32 %v764, %v1150
  %v1152 = vpop.f32.mrb[0].mxu0
  %1153 = vmatprep.mubr.f32.mxu0 0.0
  %1154 = vmatmul.mubr.f32.gmra.mrb[0].mxu0 %v846
  %v1155 = vpop.f32.mrb[0].mxu0
  %v1156 = vadd.f32 %v764, %v1155
  %v1157 = vpop.f32.mrb[0].mxu0
  %1158 = vmatprep.mubr.f32.mxu0 0.0
  %1159 = vmatmul.mubr.f32.gmra.mrb[0].mxu0 %v849
  %v1160 = vpop.f32.mrb[0].mxu0
  %v1161 = vadd.f32 %v764, %v1160
  %v1162 = vpop.f32.mrb[0].mxu0
  %1163 = vmatprep.mubr.f32.mxu0 0.0
  %1164 = vmatmul.mubr.f32.gmra.mrb[0].mxu0 %v852
  %v1165 = vpop.f32.mrb[0].mxu0
  %v1166 = vadd.f32 %v764, %v1165
  %v1167 = vpop.f32.mrb[0].mxu0
  %1168 = vmatprep.mubr.f32.mxu0 0.0
  %1169 = vmatmul.mubr.f32.gmra.mrb[0].mxu0 %v855
  %v1170 = vpop.f32.mrb[0].mxu0
  %v1171 = vadd.f32 %v764, %v1170
  %v1172 = vpop.f32.mrb[0].mxu0
  %1173 = vmatprep.mubr.f32.mxu0 0.0
  %1174 = vmatmul.mubr.f32.gmra.mrb[0].mxu0 %v858
  %v1175 = vpop.f32.mrb[0].mxu0
  %v1176 = vadd.f32 %v764, %v1175
  %v1177 = vpop.f32.mrb[0].mxu0
  %1178 = vmatprep.mubr.f32.mxu0 0.0
  %1179 = vmatmul.mubr.f32.gmra.mrb[0].mxu0 %v861
  %v1180 = vpop.f32.mrb[0].mxu0
  %v1181 = vadd.f32 %v764, %v1180
  %v1182 = vpop.f32.mrb[0].mxu0
  %1183 = vmatprep.mubr.f32.mxu0 0.0
  %1184 = vmatmul.mubr.f32.gmra.mrb[0].mxu0 %v864
  %v1185 = vpop.f32.mrb[0].mxu0
  %v1186 = vadd.f32 %v764, %v1185
  %v1187 = vpop.f32.mrb[0].mxu0
  %1188 = vmatprep.mubr.f32.mxu0 0.0
  %1189 = vmatmul.mubr.f32.gmra.mrb[0].mxu0 %v867
  %v1190 = vpop.f32.mrb[0].mxu0
  %v1191 = vadd.f32 %v764, %v1190
  %v1192 = vpop.f32.mrb[0].mxu0
  %1193 = vmatprep.mubr.f32.mxu0 0.0
  %1194 = vmatmul.mubr.f32.gmra.mrb[0].mxu0 %v870
  %v1195 = vpop.f32.mrb[0].mxu0
  %v1196 = vadd.f32 %v764, %v1195
  %v1197 = vpop.f32.mrb[0].mxu0
  %1198 = vmatprep.mubr.f32.mxu0 0.0
  %1199 = vmatmul.mubr.f32.gmra.mrb[0].mxu0 %v873
  %v1200 = vpop.f32.mrb[0].mxu0
  %v1201 = vadd.f32 %v764, %v1200
  %v1202 = vpop.f32.mrb[0].mxu0
  %1203 = vmatprep.mubr.f32.mxu0 0.0
  %1204 = vmatmul.mubr.f32.gmra.mrb[0].mxu0 %v876
  %v1205 = vpop.f32.mrb[0].mxu0
  %v1206 = vadd.f32 %v764, %v1205
  %v1207 = vpop.f32.mrb[0].mxu0
  %1208 = vmatprep.mubr.f32.mxu0 0.0
  %1209 = vmatmul.mubr.f32.gmra.mrb[0].mxu0 %v879
  %v1210 = vpop.f32.mrb[0].mxu0
  %v1211 = vadd.f32 %v764, %v1210
  %v1212 = vpop.f32.mrb[0].mxu0
  %1213 = vmatprep.mubr.f32.mxu0 0.0
  %1214 = vmatmul.mubr.f32.gmra.mrb[0].mxu0 %v882
  %v1215 = vpop.f32.mrb[0].mxu0
  %v1216 = vadd.f32 %v764, %v1215
  %v1217 = vpop.f32.mrb[0].mxu0
  %1218 = vmatprep.mubr.f32.mxu0 0.0
  %1219 = vmatmul.mubr.f32.gmra.mrb[0].mxu0 %v885
  %v1220 = vpop.f32.mrb[0].mxu0
  %v1221 = vadd.f32 %v764, %v1220
  %v1222 = vpop.f32.mrb[0].mxu0
  %1223 = vmatprep.mubr.f32.mxu0 0.0
  %1224 = vmatmul.mubr.f32.gmra.mrb[0].mxu0 %v888
  %v1225 = vpop.f32.mrb[0].mxu0
  %v1226 = vadd.f32 %v764, %v1225
  %v1227 = vpop.f32.mrb[0].mxu0
  %1228 = vmatprep.mubr.f32.mxu0 0.0
  %1229 = vmatmul.mubr.f32.gmra.mrb[0].mxu0 %v891
  %v1230 = vpop.f32.mrb[0].mxu0
  %v1231 = vadd.f32 %v764, %v1230
  %v1232 = vpop.f32.mrb[0].mxu0
  %1233 = vmatprep.mubr.f32.mxu0 0.0
  %1234 = vmatmul.mubr.f32.gmra.mrb[0].mxu0 %v894
  %v1235 = vpop.f32.mrb[0].mxu0
  %v1236 = vadd.f32 %v764, %v1235
  %v1237 = vpop.f32.mrb[0].mxu0
  %1238 = vmatprep.mubr.f32.mxu0 0.0
  %1239 = vmatmul.mubr.f32.gmra.mrb[0].mxu0 %v897
  %v1240 = vpop.f32.mrb[0].mxu0
  %v1241 = vadd.f32 %v764, %v1240
  %v1242 = vpop.f32.mrb[0].mxu0
  %1243 = vmatprep.mubr.f32.mxu0 0.0
  %1244 = vmatmul.mubr.f32.gmra.mrb[0].mxu0 %v900
  %v1245 = vpop.f32.mrb[0].mxu0
  %v1246 = vadd.f32 %v764, %v1245
  %v1247 = vpop.f32.mrb[0].mxu0
  %1248 = vmatprep.mubr.f32.mxu0 0.0
  %1249 = vmatmul.mubr.f32.gmra.mrb[0].mxu0 %v903
  %v1250 = vpop.f32.mrb[0].mxu0
  %v1251 = vadd.f32 %v764, %v1250
  %v1252 = vpop.f32.mrb[0].mxu0
  %1253 = vmatprep.mubr.f32.mxu0 0.0
  %1254 = vmatmul.mubr.f32.gmra.mrb[0].mxu0 %v906
  %v1255 = vpop.f32.mrb[0].mxu0
  %v1256 = vadd.f32 %v764, %v1255
  %v1257 = vpop.f32.mrb[0].mxu0
  %1258 = vmatprep.mubr.f32.mxu0 0.0
  %1259 = vmatmul.mubr.f32.gmra.mrb[0].mxu0 %v909
  %v1260 = vpop.f32.mrb[0].mxu0
  %v1261 = vadd.f32 %v764, %v1260
  %v1262 = vpop.f32.mrb[0].mxu0
  %1263 = vmatprep.mubr.f32.mxu0 0.0
  %1264 = vmatmul.mubr.f32.gmra.mrb[0].mxu0 %v912
  %v1265 = vpop.f32.mrb[0].mxu0
  %v1266 = vadd.f32 %v764, %v1265
  %v1267 = vpop.f32.mrb[0].mxu0
  %1268 = vmatprep.mubr.f32.mxu0 0.0
  %1269 = vmatmul.mubr.f32.gmra.mrb[0].mxu0 %v915
  %v1270 = vpop.f32.mrb[0].mxu0
  %v1271 = vadd.f32 %v764, %v1270
  %v1272 = vpop.f32.mrb[0].mxu0
  %1273 = vmatprep.mubr.f32.mxu0 0.0
  %1274 = vmatmul.mubr.f32.gmra.mrb[0].mxu0 %v918
  %v1275 = vpop.f32.mrb[0].mxu0
  %v1276 = vadd.f32 %v764, %v1275
  %v1277 = vpop.f32.mrb[0].mxu0
  %1278 = vmatprep.mubr.f32.mxu0 0.0
  %1279 = vmatmul.mubr.f32.gmra.mrb[0].mxu0 %v921
  %v1280 = vpop.f32.mrb[0].mxu0
  %v1281 = vadd.f32 %v764, %v1280
  %v1282 = vpop.f32.mrb[0].mxu0
  %1283 = vmatprep.mubr.f32.mxu0 0.0
  %1284 = vmatmul.mubr.f32.gmra.mrb[0].mxu0 %v924
  %v1285 = vpop.f32.mrb[0].mxu0
  %v1286 = vadd.f32 %v764, %v1285
  %v1287 = vpop.f32.mrb[0].mxu0
  %1288 = vmatprep.mubr.f32.mxu0 0.0
  %1289 = vmatmul.mubr.f32.gmra.mrb[0].mxu0 %v927
  %v1290 = vpop.f32.mrb[0].mxu0
  %v1291 = vadd.f32 %v764, %v1290
  %v1292 = vpop.f32.mrb[0].mxu0
  %1293 = vmatprep.mubr.f32.mxu0 0.0
  %1294 = vmatmul.mubr.f32.gmra.mrb[0].mxu0 %v930
  %v1295 = vpop.f32.mrb[0].mxu0
  %v1296 = vadd.f32 %v764, %v1295
  %v1297 = vpop.f32.mrb[0].mxu0
  %1298 = vmatprep.mubr.f32.mxu0 0.0
  %1299 = vmatmul.mubr.f32.gmra.mrb[0].mxu0 %v933
  %v1300 = vpop.f32.mrb[0].mxu0
  %v1301 = vadd.f32 %v764, %v1300
  %v1302 = vpop.f32.mrb[0].mxu0
  %1303 = vmatprep.mubr.f32.mxu0 0.0
  %1304 = vmatmul.mubr.f32.gmra.mrb[0].mxu0 %v936
  %v1305 = vpop.f32.mrb[0].mxu0
  %v1306 = vadd.f32 %v764, %v1305
  %v1307 = vpop.f32.mrb[0].mxu0
  %1308 = vmatprep.mubr.f32.mxu0 0.0
  %1309 = vmatmul.mubr.f32.gmra.mrb[0].mxu0 %v939
  %v1310 = vpop.f32.mrb[0].mxu0
  %v1311 = vadd.f32 %v764, %v1310
  %v1312 = vpop.f32.mrb[0].mxu0
  %1313 = vmatprep.mubr.f32.mxu0 0.0
  %1314 = vmatmul.mubr.f32.gmra.mrb[0].mxu0 %v942
  %v1315 = vpop.f32.mrb[0].mxu0
  %v1316 = vadd.f32 %v764, %v1315
  %v1317 = vpop.f32.mrb[0].mxu0
  %1318 = vmatprep.mubr.f32.mxu0 0.0
  %1319 = vmatmul.mubr.f32.gmra.mrb[0].mxu0 %v945
  %v1320 = vpop.f32.mrb[0].mxu0
  %v1321 = vadd.f32 %v764, %v1320
  %v1322 = vpop.f32.mrb[0].mxu0
  %1323 = vmatprep.mubr.f32.mxu0 0.0
  %1324 = vmatmul.mubr.f32.gmra.mrb[0].mxu0 %v948
  %v1325 = vpop.f32.mrb[0].mxu0
  %v1326 = vadd.f32 %v764, %v1325
  %v1327 = vpop.f32.mrb[0].mxu0
  %1328 = vmatprep.mubr.f32.mxu0 0.0
  %1329 = vmatmul.mubr.f32.gmra.mrb[0].mxu0 %v951
  %v1330 = vpop.f32.mrb[0].mxu0
  %v1331 = vadd.f32 %v764, %v1330
  %v1332 = vpop.f32.mrb[0].mxu0
  %1333 = vmatprep.mubr.f32.mxu0 0.0
  %1334 = vmatmul.mubr.f32.gmra.mrb[0].mxu0 %v954
  %v1335 = vpop.f32.mrb[0].mxu0
  %v1336 = vadd.f32 %v764, %v1335
  %v1337 = vpop.f32.mrb[0].mxu0
  %1338 = vmatprep.mubr.f32.mxu0 0.0
  %1339 = vmatmul.mubr.f32.gmra.mrb[0].mxu0 %v957
  %v1340 = vpop.f32.mrb[0].mxu0
  %v1341 = vadd.f32 %v764, %v1340
  %v1342 = vpop.f32.mrb[0].mxu0
  %1343 = vdwg.mxu0
  %v1344 = vld [vmem:[%s5] sm:$0xff]
  %v1345 = vld [vmem:[%s5 + $0x8] sm:$0xff]
  %v1346 = vld [vmem:[%s6] sm:$0x1]
  %v1348 = vlaneseq
  %v1349 = vshrl.u32 %v1348, 7
  %v1350 = vsub.s32 0, %v1349
  %v1351 = vrot.slane %v1346, %v1350
  %vm1353 = vcmask 130048
  %v1355 = vsel %vm1353, %v1026, 0
  %v1358 = vsel %vm1353, %v1031, 0
  %v1361 = vsel %vm1353, %v1036, 0
  %v1364 = vsel %vm1353, %v1041, 0
  %v1367 = vsel %vm1353, %v1046, 0
  %v1370 = vsel %vm1353, %v1051, 0
  %v1373 = vsel %vm1353, %v1056, 0
  %v1376 = vsel %vm1353, %v1061, 0
  %v1379 = vsel %vm1353, %v1066, 0
  %v1382 = vsel %vm1353, %v1071, 0
  %v1385 = vsel %vm1353, %v1076, 0
  %v1388 = vsel %vm1353, %v1081, 0
  %v1391 = vsel %vm1353, %v1086, 0
  %v1394 = vsel %vm1353, %v1091, 0
  %v1397 = vsel %vm1353, %v1096, 0
  %v1400 = vsel %vm1353, %v1101, 0
  %v1403 = vsel %vm1353, %v1106, 0
  %v1406 = vsel %vm1353, %v1111, 0
  %v1409 = vsel %vm1353, %v1116, 0
  %v1412 = vsel %vm1353, %v1121, 0
  %v1415 = vsel %vm1353, %v1126, 0
  %v1418 = vsel %vm1353, %v1131, 0
  %v1421 = vsel %vm1353, %v1136, 0
  %v1424 = vsel %vm1353, %v1141, 0
  %v1427 = vsel %vm1353, %v1146, 0
  %v1430 = vsel %vm1353, %v1151, 0
  %v1433 = vsel %vm1353, %v1156, 0
  %v1436 = vsel %vm1353, %v1161, 0
  %v1439 = vsel %vm1353, %v1166, 0
  %v1442 = vsel %vm1353, %v1171, 0
  %v1445 = vsel %vm1353, %v1176, 0
  %v1448 = vsel %vm1353, %v1181, 0
  %v1451 = vsel %vm1353, %v1186, 0
  %v1454 = vsel %vm1353, %v1191, 0
  %v1457 = vsel %vm1353, %v1196, 0
  %v1460 = vsel %vm1353, %v1201, 0
  %v1463 = vsel %vm1353, %v1206, 0
  %v1466 = vsel %vm1353, %v1211, 0
  %v1469 = vsel %vm1353, %v1216, 0
  %v1472 = vsel %vm1353, %v1221, 0
  %v1475 = vsel %vm1353, %v1226, 0
  %v1478 = vsel %vm1353, %v1231, 0
  %v1481 = vsel %vm1353, %v1236, 0
  %v1484 = vsel %vm1353, %v1241, 0
  %v1487 = vsel %vm1353, %v1246, 0
  %v1490 = vsel %vm1353, %v1251, 0
  %v1493 = vsel %vm1353, %v1256, 0
  %v1496 = vsel %vm1353, %v1261, 0
  %v1499 = vsel %vm1353, %v1266, 0
  %v1502 = vsel %vm1353, %v1271, 0
  %v1505 = vsel %vm1353, %v1276, 0
  %v1508 = vsel %vm1353, %v1281, 0
  %v1511 = vsel %vm1353, %v1286, 0
  %v1514 = vsel %vm1353, %v1291, 0
  %v1517 = vsel %vm1353, %v1296, 0
  %v1520 = vsel %vm1353, %v1301, 0
  %v1523 = vsel %vm1353, %v1306, 0
  %v1526 = vsel %vm1353, %v1311, 0
  %v1529 = vsel %vm1353, %v1316, 0
  %v1532 = vsel %vm1353, %v1321, 0
  %v1535 = vsel %vm1353, %v1326, 0
  %v1538 = vsel %vm1353, %v1331, 0
  %v1541 = vsel %vm1353, %v1336, 0
  %v1544 = vsel %vm1353, %v1341, 0
  %1546 = vmatprep.subr.mxu0 0.0
  %1547 = vmatpush1.msra.mxu0 %v1344
  %1548 = vmatprep.subr.mxu0 0.0
  %1549 = vmatpush1.msra.mxu0 %v1345
  %1550 = vmatprep.subr.mxu0 0.0
  %1551 = vmatpush1.msra.mxu0 0.0
  %1552 = vmatprep.subr.mxu0 0.0
  %1553 = vmatpush1.msra.mxu0 0.0
  %1554 = vmatprep.subr.mxu0 0.0
  %1555 = vmatpush1.msra.mxu0 0.0
  %1556 = vmatprep.subr.mxu0 0.0
  %1557 = vmatpush1.msra.mxu0 0.0
  %1558 = vmatprep.subr.mxu0 0.0
  %1559 = vmatpush1.msra.mxu0 0.0
  %1560 = vmatprep.subr.mxu0 0.0
  %1561 = vmatpush1.msra.mxu0 0.0
  %1562 = vmatprep.subr.mxu0 0.0
  %1563 = vmatpush1.msra.mxu0 0.0
  %1564 = vmatprep.subr.mxu0 0.0
  %1565 = vmatpush1.msra.mxu0 0.0
  %1566 = vmatprep.subr.mxu0 0.0
  %1567 = vmatpush1.msra.mxu0 0.0
  %1568 = vmatprep.subr.mxu0 0.0
  %1569 = vmatpush1.msra.mxu0 0.0
  %1570 = vmatprep.subr.mxu0 0.0
  %1571 = vmatpush1.msra.mxu0 0.0
  %1572 = vmatprep.subr.mxu0 0.0
  %1573 = vmatpush1.msra.mxu0 0.0
  %1574 = vmatprep.subr.mxu0 0.0
  %1575 = vmatpush1.msra.mxu0 0.0
  %1576 = vmatprep.subr.mxu0 0.0
  %1577 = vmatpush1.msra.mxu0 0.0
  %1578 = vmatprep.subr.mxu0 0.0
  %1579 = vmatpush1.msra.mxu0 0.0
  %1580 = vmatprep.subr.mxu0 0.0
  %1581 = vmatpush1.msra.mxu0 0.0
  %1582 = vmatprep.subr.mxu0 0.0
  %1583 = vmatpush1.msra.mxu0 0.0
  %1584 = vmatprep.subr.mxu0 0.0
  %1585 = vmatpush1.msra.mxu0 0.0
  %1586 = vmatprep.subr.mxu0 0.0
  %1587 = vmatpush1.msra.mxu0 0.0
  %1588 = vmatprep.subr.mxu0 0.0
  %1589 = vmatpush1.msra.mxu0 0.0
  %1590 = vmatprep.subr.mxu0 0.0
  %1591 = vmatpush1.msra.mxu0 0.0
  %1592 = vmatprep.subr.mxu0 0.0
  %1593 = vmatpush1.msra.mxu0 0.0
  %1594 = vmatprep.subr.mxu0 0.0
  %1595 = vmatpush1.msra.mxu0 0.0
  %1596 = vmatprep.subr.mxu0 0.0
  %1597 = vmatpush1.msra.mxu0 0.0
  %1598 = vmatprep.subr.mxu0 0.0
  %1599 = vmatpush1.msra.mxu0 0.0
  %1600 = vmatprep.subr.mxu0 0.0
  %1601 = vmatpush1.msra.mxu0 0.0
  %1602 = vmatprep.subr.mxu0 0.0
  %1603 = vmatpush1.msra.mxu0 0.0
  %1604 = vmatprep.subr.mxu0 0.0
  %1605 = vmatpush1.msra.mxu0 0.0
  %1606 = vmatprep.subr.mxu0 0.0
  %1607 = vmatpush1.msra.mxu0 0.0
  %1608 = vmatprep.subr.mxu0 0.0
  %1609 = vmatpush1.msra.mxu0 0.0
  %1610 = vmatprep.mubr.f32.mxu0 0.0
  %1611 = vmatmul.mubr.f32.gmra.mrb[0].mxu0 %v1355
  %v1612 = vpop.f32.mrb[0].mxu0
  %v1613 = vadd.f32 %v1351, %v1612
  %v1614 = vpop.f32.mrb[0].mxu0
  %1615 = vmatprep.mubr.f32.mxu0 0.0
  %1616 = vmatmul.mubr.f32.gmra.mrb[0].mxu0 %v1358
  %v1617 = vpop.f32.mrb[0].mxu0
  %v1618 = vadd.f32 %v1351, %v1617
  %v1619 = vpop.f32.mrb[0].mxu0
  %1620 = vmatprep.mubr.f32.mxu0 0.0
  %1621 = vmatmul.mubr.f32.gmra.mrb[0].mxu0 %v1361
  %v1622 = vpop.f32.mrb[0].mxu0
  %v1623 = vadd.f32 %v1351, %v1622
  %v1624 = vpop.f32.mrb[0].mxu0
  %1625 = vmatprep.mubr.f32.mxu0 0.0
  %1626 = vmatmul.mubr.f32.gmra.mrb[0].mxu0 %v1364
  %v1627 = vpop.f32.mrb[0].mxu0
  %v1628 = vadd.f32 %v1351, %v1627
  %v1629 = vpop.f32.mrb[0].mxu0
  %1630 = vmatprep.mubr.f32.mxu0 0.0
  %1631 = vmatmul.mubr.f32.gmra.mrb[0].mxu0 %v1367
  %v1632 = vpop.f32.mrb[0].mxu0
  %v1633 = vadd.f32 %v1351, %v1632
  %v1634 = vpop.f32.mrb[0].mxu0
  %1635 = vmatprep.mubr.f32.mxu0 0.0
  %1636 = vmatmul.mubr.f32.gmra.mrb[0].mxu0 %v1370
  %v1637 = vpop.f32.mrb[0].mxu0
  %v1638 = vadd.f32 %v1351, %v1637
  %v1639 = vpop.f32.mrb[0].mxu0
  %1640 = vmatprep.mubr.f32.mxu0 0.0
  %1641 = vmatmul.mubr.f32.gmra.mrb[0].mxu0 %v1373
  %v1642 = vpop.f32.mrb[0].mxu0
  %v1643 = vadd.f32 %v1351, %v1642
  %v1644 = vpop.f32.mrb[0].mxu0
  %1645 = vmatprep.mubr.f32.mxu0 0.0
  %1646 = vmatmul.mubr.f32.gmra.mrb[0].mxu0 %v1376
  %v1647 = vpop.f32.mrb[0].mxu0
  %v1648 = vadd.f32 %v1351, %v1647
  %v1649 = vpop.f32.mrb[0].mxu0
  %1650 = vmatprep.mubr.f32.mxu0 0.0
  %1651 = vmatmul.mubr.f32.gmra.mrb[0].mxu0 %v1379
  %v1652 = vpop.f32.mrb[0].mxu0
  %v1653 = vadd.f32 %v1351, %v1652
  %v1654 = vpop.f32.mrb[0].mxu0
  %1655 = vmatprep.mubr.f32.mxu0 0.0
  %1656 = vmatmul.mubr.f32.gmra.mrb[0].mxu0 %v1382
  %v1657 = vpop.f32.mrb[0].mxu0
  %v1658 = vadd.f32 %v1351, %v1657
  %v1659 = vpop.f32.mrb[0].mxu0
  %1660 = vmatprep.mubr.f32.mxu0 0.0
  %1661 = vmatmul.mubr.f32.gmra.mrb[0].mxu0 %v1385
  %v1662 = vpop.f32.mrb[0].mxu0
  %v1663 = vadd.f32 %v1351, %v1662
  %v1664 = vpop.f32.mrb[0].mxu0
  %1665 = vmatprep.mubr.f32.mxu0 0.0
  %1666 = vmatmul.mubr.f32.gmra.mrb[0].mxu0 %v1388
  %v1667 = vpop.f32.mrb[0].mxu0
  %v1668 = vadd.f32 %v1351, %v1667
  %v1669 = vpop.f32.mrb[0].mxu0
  %1670 = vmatprep.mubr.f32.mxu0 0.0
  %1671 = vmatmul.mubr.f32.gmra.mrb[0].mxu0 %v1391
  %v1672 = vpop.f32.mrb[0].mxu0
  %v1673 = vadd.f32 %v1351, %v1672
  %v1674 = vpop.f32.mrb[0].mxu0
  %1675 = vmatprep.mubr.f32.mxu0 0.0
  %1676 = vmatmul.mubr.f32.gmra.mrb[0].mxu0 %v1394
  %v1677 = vpop.f32.mrb[0].mxu0
  %v1678 = vadd.f32 %v1351, %v1677
  %v1679 = vpop.f32.mrb[0].mxu0
  %1680 = vmatprep.mubr.f32.mxu0 0.0
  %1681 = vmatmul.mubr.f32.gmra.mrb[0].mxu0 %v1397
  %v1682 = vpop.f32.mrb[0].mxu0
  %v1683 = vadd.f32 %v1351, %v1682
  %v1684 = vpop.f32.mrb[0].mxu0
  %1685 = vmatprep.mubr.f32.mxu0 0.0
  %1686 = vmatmul.mubr.f32.gmra.mrb[0].mxu0 %v1400
  %v1687 = vpop.f32.mrb[0].mxu0
  %v1688 = vadd.f32 %v1351, %v1687
  %v1689 = vpop.f32.mrb[0].mxu0
  %1690 = vmatprep.mubr.f32.mxu0 0.0
  %1691 = vmatmul.mubr.f32.gmra.mrb[0].mxu0 %v1403
  %v1692 = vpop.f32.mrb[0].mxu0
  %v1693 = vadd.f32 %v1351, %v1692
  %v1694 = vpop.f32.mrb[0].mxu0
  %1695 = vmatprep.mubr.f32.mxu0 0.0
  %1696 = vmatmul.mubr.f32.gmra.mrb[0].mxu0 %v1406
  %v1697 = vpop.f32.mrb[0].mxu0
  %v1698 = vadd.f32 %v1351, %v1697
  %v1699 = vpop.f32.mrb[0].mxu0
  %1700 = vmatprep.mubr.f32.mxu0 0.0
  %1701 = vmatmul.mubr.f32.gmra.mrb[0].mxu0 %v1409
  %v1702 = vpop.f32.mrb[0].mxu0
  %v1703 = vadd.f32 %v1351, %v1702
  %v1704 = vpop.f32.mrb[0].mxu0
  %1705 = vmatprep.mubr.f32.mxu0 0.0
  %1706 = vmatmul.mubr.f32.gmra.mrb[0].mxu0 %v1412
  %v1707 = vpop.f32.mrb[0].mxu0
  %v1708 = vadd.f32 %v1351, %v1707
  %v1709 = vpop.f32.mrb[0].mxu0
  %1710 = vmatprep.mubr.f32.mxu0 0.0
  %1711 = vmatmul.mubr.f32.gmra.mrb[0].mxu0 %v1415
  %v1712 = vpop.f32.mrb[0].mxu0
  %v1713 = vadd.f32 %v1351, %v1712
  %v1714 = vpop.f32.mrb[0].mxu0
  %1715 = vmatprep.mubr.f32.mxu0 0.0
  %1716 = vmatmul.mubr.f32.gmra.mrb[0].mxu0 %v1418
  %v1717 = vpop.f32.mrb[0].mxu0
  %v1718 = vadd.f32 %v1351, %v1717
  %v1719 = vpop.f32.mrb[0].mxu0
  %1720 = vmatprep.mubr.f32.mxu0 0.0
  %1721 = vmatmul.mubr.f32.gmra.mrb[0].mxu0 %v1421
  %v1722 = vpop.f32.mrb[0].mxu0
  %v1723 = vadd.f32 %v1351, %v1722
  %v1724 = vpop.f32.mrb[0].mxu0
  %1725 = vmatprep.mubr.f32.mxu0 0.0
  %1726 = vmatmul.mubr.f32.gmra.mrb[0].mxu0 %v1424
  %v1727 = vpop.f32.mrb[0].mxu0
  %v1728 = vadd.f32 %v1351, %v1727
  %v1729 = vpop.f32.mrb[0].mxu0
  %1730 = vmatprep.mubr.f32.mxu0 0.0
  %1731 = vmatmul.mubr.f32.gmra.mrb[0].mxu0 %v1427
  %v1732 = vpop.f32.mrb[0].mxu0
  %v1733 = vadd.f32 %v1351, %v1732
  %v1734 = vpop.f32.mrb[0].mxu0
  %1735 = vmatprep.mubr.f32.mxu0 0.0
  %1736 = vmatmul.mubr.f32.gmra.mrb[0].mxu0 %v1430
  %v1737 = vpop.f32.mrb[0].mxu0
  %v1738 = vadd.f32 %v1351, %v1737
  %v1739 = vpop.f32.mrb[0].mxu0
  %1740 = vmatprep.mubr.f32.mxu0 0.0
  %1741 = vmatmul.mubr.f32.gmra.mrb[0].mxu0 %v1433
  %v1742 = vpop.f32.mrb[0].mxu0
  %v1743 = vadd.f32 %v1351, %v1742
  %v1744 = vpop.f32.mrb[0].mxu0
  %1745 = vmatprep.mubr.f32.mxu0 0.0
  %1746 = vmatmul.mubr.f32.gmra.mrb[0].mxu0 %v1436
  %v1747 = vpop.f32.mrb[0].mxu0
  %v1748 = vadd.f32 %v1351, %v1747
  %v1749 = vpop.f32.mrb[0].mxu0
  %1750 = vmatprep.mubr.f32.mxu0 0.0
  %1751 = vmatmul.mubr.f32.gmra.mrb[0].mxu0 %v1439
  %v1752 = vpop.f32.mrb[0].mxu0
  %v1753 = vadd.f32 %v1351, %v1752
  %v1754 = vpop.f32.mrb[0].mxu0
  %1755 = vmatprep.mubr.f32.mxu0 0.0
  %1756 = vmatmul.mubr.f32.gmra.mrb[0].mxu0 %v1442
  %v1757 = vpop.f32.mrb[0].mxu0
  %v1758 = vadd.f32 %v1351, %v1757
  %v1759 = vpop.f32.mrb[0].mxu0
  %1760 = vmatprep.mubr.f32.mxu0 0.0
  %1761 = vmatmul.mubr.f32.gmra.mrb[0].mxu0 %v1445
  %v1762 = vpop.f32.mrb[0].mxu0
  %v1763 = vadd.f32 %v1351, %v1762
  %v1764 = vpop.f32.mrb[0].mxu0
  %1765 = vmatprep.mubr.f32.mxu0 0.0
  %1766 = vmatmul.mubr.f32.gmra.mrb[0].mxu0 %v1448
  %v1767 = vpop.f32.mrb[0].mxu0
  %v1768 = vadd.f32 %v1351, %v1767
  %v1769 = vpop.f32.mrb[0].mxu0
  %1770 = vmatprep.mubr.f32.mxu0 0.0
  %1771 = vmatmul.mubr.f32.gmra.mrb[0].mxu0 %v1451
  %v1772 = vpop.f32.mrb[0].mxu0
  %v1773 = vadd.f32 %v1351, %v1772
  %v1774 = vpop.f32.mrb[0].mxu0
  %1775 = vmatprep.mubr.f32.mxu0 0.0
  %1776 = vmatmul.mubr.f32.gmra.mrb[0].mxu0 %v1454
  %v1777 = vpop.f32.mrb[0].mxu0
  %v1778 = vadd.f32 %v1351, %v1777
  %v1779 = vpop.f32.mrb[0].mxu0
  %1780 = vmatprep.mubr.f32.mxu0 0.0
  %1781 = vmatmul.mubr.f32.gmra.mrb[0].mxu0 %v1457
  %v1782 = vpop.f32.mrb[0].mxu0
  %v1783 = vadd.f32 %v1351, %v1782
  %v1784 = vpop.f32.mrb[0].mxu0
  %1785 = vmatprep.mubr.f32.mxu0 0.0
  %1786 = vmatmul.mubr.f32.gmra.mrb[0].mxu0 %v1460
  %v1787 = vpop.f32.mrb[0].mxu0
  %v1788 = vadd.f32 %v1351, %v1787
  %v1789 = vpop.f32.mrb[0].mxu0
  %1790 = vmatprep.mubr.f32.mxu0 0.0
  %1791 = vmatmul.mubr.f32.gmra.mrb[0].mxu0 %v1463
  %v1792 = vpop.f32.mrb[0].mxu0
  %v1793 = vadd.f32 %v1351, %v1792
  %v1794 = vpop.f32.mrb[0].mxu0
  %1795 = vmatprep.mubr.f32.mxu0 0.0
  %1796 = vmatmul.mubr.f32.gmra.mrb[0].mxu0 %v1466
  %v1797 = vpop.f32.mrb[0].mxu0
  %v1798 = vadd.f32 %v1351, %v1797
  %v1799 = vpop.f32.mrb[0].mxu0
  %1800 = vmatprep.mubr.f32.mxu0 0.0
  %1801 = vmatmul.mubr.f32.gmra.mrb[0].mxu0 %v1469
  %v1802 = vpop.f32.mrb[0].mxu0
  %v1803 = vadd.f32 %v1351, %v1802
  %v1804 = vpop.f32.mrb[0].mxu0
  %1805 = vmatprep.mubr.f32.mxu0 0.0
  %1806 = vmatmul.mubr.f32.gmra.mrb[0].mxu0 %v1472
  %v1807 = vpop.f32.mrb[0].mxu0
  %v1808 = vadd.f32 %v1351, %v1807
  %v1809 = vpop.f32.mrb[0].mxu0
  %1810 = vmatprep.mubr.f32.mxu0 0.0
  %1811 = vmatmul.mubr.f32.gmra.mrb[0].mxu0 %v1475
  %v1812 = vpop.f32.mrb[0].mxu0
  %v1813 = vadd.f32 %v1351, %v1812
  %v1814 = vpop.f32.mrb[0].mxu0
  %1815 = vmatprep.mubr.f32.mxu0 0.0
  %1816 = vmatmul.mubr.f32.gmra.mrb[0].mxu0 %v1478
  %v1817 = vpop.f32.mrb[0].mxu0
  %v1818 = vadd.f32 %v1351, %v1817
  %v1819 = vpop.f32.mrb[0].mxu0
  %1820 = vmatprep.mubr.f32.mxu0 0.0
  %1821 = vmatmul.mubr.f32.gmra.mrb[0].mxu0 %v1481
  %v1822 = vpop.f32.mrb[0].mxu0
  %v1823 = vadd.f32 %v1351, %v1822
  %v1824 = vpop.f32.mrb[0].mxu0
  %1825 = vmatprep.mubr.f32.mxu0 0.0
  %1826 = vmatmul.mubr.f32.gmra.mrb[0].mxu0 %v1484
  %v1827 = vpop.f32.mrb[0].mxu0
  %v1828 = vadd.f32 %v1351, %v1827
  %v1829 = vpop.f32.mrb[0].mxu0
  %1830 = vmatprep.mubr.f32.mxu0 0.0
  %1831 = vmatmul.mubr.f32.gmra.mrb[0].mxu0 %v1487
  %v1832 = vpop.f32.mrb[0].mxu0
  %v1833 = vadd.f32 %v1351, %v1832
  %v1834 = vpop.f32.mrb[0].mxu0
  %1835 = vmatprep.mubr.f32.mxu0 0.0
  %1836 = vmatmul.mubr.f32.gmra.mrb[0].mxu0 %v1490
  %v1837 = vpop.f32.mrb[0].mxu0
  %v1838 = vadd.f32 %v1351, %v1837
  %v1839 = vpop.f32.mrb[0].mxu0
  %1840 = vmatprep.mubr.f32.mxu0 0.0
  %1841 = vmatmul.mubr.f32.gmra.mrb[0].mxu0 %v1493
  %v1842 = vpop.f32.mrb[0].mxu0
  %v1843 = vadd.f32 %v1351, %v1842
  %v1844 = vpop.f32.mrb[0].mxu0
  %1845 = vmatprep.mubr.f32.mxu0 0.0
  %1846 = vmatmul.mubr.f32.gmra.mrb[0].mxu0 %v1496
  %v1847 = vpop.f32.mrb[0].mxu0
  %v1848 = vadd.f32 %v1351, %v1847
  %v1849 = vpop.f32.mrb[0].mxu0
  %1850 = vmatprep.mubr.f32.mxu0 0.0
  %1851 = vmatmul.mubr.f32.gmra.mrb[0].mxu0 %v1499
  %v1852 = vpop.f32.mrb[0].mxu0
  %v1853 = vadd.f32 %v1351, %v1852
  %v1854 = vpop.f32.mrb[0].mxu0
  %1855 = vmatprep.mubr.f32.mxu0 0.0
  %1856 = vmatmul.mubr.f32.gmra.mrb[0].mxu0 %v1502
  %v1857 = vpop.f32.mrb[0].mxu0
  %v1858 = vadd.f32 %v1351, %v1857
  %v1859 = vpop.f32.mrb[0].mxu0
  %1860 = vmatprep.mubr.f32.mxu0 0.0
  %1861 = vmatmul.mubr.f32.gmra.mrb[0].mxu0 %v1505
  %v1862 = vpop.f32.mrb[0].mxu0
  %v1863 = vadd.f32 %v1351, %v1862
  %v1864 = vpop.f32.mrb[0].mxu0
  %1865 = vmatprep.mubr.f32.mxu0 0.0
  %1866 = vmatmul.mubr.f32.gmra.mrb[0].mxu0 %v1508
  %v1867 = vpop.f32.mrb[0].mxu0
  %v1868 = vadd.f32 %v1351, %v1867
  %v1869 = vpop.f32.mrb[0].mxu0
  %1870 = vmatprep.mubr.f32.mxu0 0.0
  %1871 = vmatmul.mubr.f32.gmra.mrb[0].mxu0 %v1511
  %v1872 = vpop.f32.mrb[0].mxu0
  %v1873 = vadd.f32 %v1351, %v1872
  %v1874 = vpop.f32.mrb[0].mxu0
  %1875 = vmatprep.mubr.f32.mxu0 0.0
  %1876 = vmatmul.mubr.f32.gmra.mrb[0].mxu0 %v1514
  %v1877 = vpop.f32.mrb[0].mxu0
  %v1878 = vadd.f32 %v1351, %v1877
  %v1879 = vpop.f32.mrb[0].mxu0
  %1880 = vmatprep.mubr.f32.mxu0 0.0
  %1881 = vmatmul.mubr.f32.gmra.mrb[0].mxu0 %v1517
  %v1882 = vpop.f32.mrb[0].mxu0
  %v1883 = vadd.f32 %v1351, %v1882
  %v1884 = vpop.f32.mrb[0].mxu0
  %1885 = vmatprep.mubr.f32.mxu0 0.0
  %1886 = vmatmul.mubr.f32.gmra.mrb[0].mxu0 %v1520
  %v1887 = vpop.f32.mrb[0].mxu0
  %v1888 = vadd.f32 %v1351, %v1887
  %v1889 = vpop.f32.mrb[0].mxu0
  %1890 = vmatprep.mubr.f32.mxu0 0.0
  %1891 = vmatmul.mubr.f32.gmra.mrb[0].mxu0 %v1523
  %v1892 = vpop.f32.mrb[0].mxu0
  %v1893 = vadd.f32 %v1351, %v1892
  %v1894 = vpop.f32.mrb[0].mxu0
  %1895 = vmatprep.mubr.f32.mxu0 0.0
  %1896 = vmatmul.mubr.f32.gmra.mrb[0].mxu0 %v1526
  %v1897 = vpop.f32.mrb[0].mxu0
  %v1898 = vadd.f32 %v1351, %v1897
  %v1899 = vpop.f32.mrb[0].mxu0
  %1900 = vmatprep.mubr.f32.mxu0 0.0
  %1901 = vmatmul.mubr.f32.gmra.mrb[0].mxu0 %v1529
  %v1902 = vpop.f32.mrb[0].mxu0
  %v1903 = vadd.f32 %v1351, %v1902
  %v1904 = vpop.f32.mrb[0].mxu0
  %1905 = vmatprep.mubr.f32.mxu0 0.0
  %1906 = vmatmul.mubr.f32.gmra.mrb[0].mxu0 %v1532
  %v1907 = vpop.f32.mrb[0].mxu0
  %v1908 = vadd.f32 %v1351, %v1907
  %v1909 = vpop.f32.mrb[0].mxu0
  %1910 = vmatprep.mubr.f32.mxu0 0.0
  %1911 = vmatmul.mubr.f32.gmra.mrb[0].mxu0 %v1535
  %v1912 = vpop.f32.mrb[0].mxu0
  %v1913 = vadd.f32 %v1351, %v1912
  %v1914 = vpop.f32.mrb[0].mxu0
  %1915 = vmatprep.mubr.f32.mxu0 0.0
  %1916 = vmatmul.mubr.f32.gmra.mrb[0].mxu0 %v1538
  %v1917 = vpop.f32.mrb[0].mxu0
  %v1918 = vadd.f32 %v1351, %v1917
  %v1919 = vpop.f32.mrb[0].mxu0
  %1920 = vmatprep.mubr.f32.mxu0 0.0
  %1921 = vmatmul.mubr.f32.gmra.mrb[0].mxu0 %v1541
  %v1922 = vpop.f32.mrb[0].mxu0
  %v1923 = vadd.f32 %v1351, %v1922
  %v1924 = vpop.f32.mrb[0].mxu0
  %1925 = vmatprep.mubr.f32.mxu0 0.0
  %1926 = vmatmul.mubr.f32.gmra.mrb[0].mxu0 %v1544
  %v1927 = vpop.f32.mrb[0].mxu0
  %v1928 = vadd.f32 %v1351, %v1927
  %v1929 = vpop.f32.mrb[0].mxu0
  %1930 = vdwg.mxu0
  %v1931 = vmax.f32 %v1613, 0.0
  %v1932 = vmax.f32 %v1618, 0.0
  %v1933 = vmax.f32 %v1623, 0.0
  %v1934 = vmax.f32 %v1628, 0.0
  %v1935 = vmax.f32 %v1633, 0.0
  %v1936 = vmax.f32 %v1638, 0.0
  %v1937 = vmax.f32 %v1643, 0.0
  %v1938 = vmax.f32 %v1648, 0.0
  %v1939 = vmax.f32 %v1653, 0.0
  %v1940 = vmax.f32 %v1658, 0.0
  %v1941 = vmax.f32 %v1663, 0.0
  %v1942 = vmax.f32 %v1668, 0.0
  %v1943 = vmax.f32 %v1673, 0.0
  %v1944 = vmax.f32 %v1678, 0.0
  %v1945 = vmax.f32 %v1683, 0.0
  %v1946 = vmax.f32 %v1688, 0.0
  %v1947 = vmax.f32 %v1693, 0.0
  %v1948 = vmax.f32 %v1698, 0.0
  %v1949 = vmax.f32 %v1703, 0.0
  %v1950 = vmax.f32 %v1708, 0.0
  %v1951 = vmax.f32 %v1713, 0.0
  %v1952 = vmax.f32 %v1718, 0.0
  %v1953 = vmax.f32 %v1723, 0.0
  %v1954 = vmax.f32 %v1728, 0.0
  %v1955 = vmax.f32 %v1733, 0.0
  %v1956 = vmax.f32 %v1738, 0.0
  %v1957 = vmax.f32 %v1743, 0.0
  %v1958 = vmax.f32 %v1748, 0.0
  %v1959 = vmax.f32 %v1753, 0.0
  %v1960 = vmax.f32 %v1758, 0.0
  %v1961 = vmax.f32 %v1763, 0.0
  %v1962 = vmax.f32 %v1768, 0.0
  %v1963 = vmax.f32 %v1773, 0.0
  %v1964 = vmax.f32 %v1778, 0.0
  %v1965 = vmax.f32 %v1783, 0.0
  %v1966 = vmax.f32 %v1788, 0.0
  %v1967 = vmax.f32 %v1793, 0.0
  %v1968 = vmax.f32 %v1798, 0.0
  %v1969 = vmax.f32 %v1803, 0.0
  %v1970 = vmax.f32 %v1808, 0.0
  %v1971 = vmax.f32 %v1813, 0.0
  %v1972 = vmax.f32 %v1818, 0.0
  %v1973 = vmax.f32 %v1823, 0.0
  %v1974 = vmax.f32 %v1828, 0.0
  %v1975 = vmax.f32 %v1833, 0.0
  %v1976 = vmax.f32 %v1838, 0.0
  %v1977 = vmax.f32 %v1843, 0.0
  %v1978 = vmax.f32 %v1848, 0.0
  %v1979 = vmax.f32 %v1853, 0.0
  %v1980 = vmax.f32 %v1858, 0.0
  %v1981 = vmax.f32 %v1863, 0.0
  %v1982 = vmax.f32 %v1868, 0.0
  %v1983 = vmax.f32 %v1873, 0.0
  %v1984 = vmax.f32 %v1878, 0.0
  %v1985 = vmax.f32 %v1883, 0.0
  %v1986 = vmax.f32 %v1888, 0.0
  %v1987 = vmax.f32 %v1893, 0.0
  %v1988 = vmax.f32 %v1898, 0.0
  %v1989 = vmax.f32 %v1903, 0.0
  %v1990 = vmax.f32 %v1908, 0.0
  %v1991 = vmax.f32 %v1913, 0.0
  %v1992 = vmax.f32 %v1918, 0.0
  %v1993 = vmax.f32 %v1923, 0.0
  %v1994 = vmax.f32 %v1928, 0.0
  %v1995 = vld [vmem:[%s7] sm:$0xff]
  %v1996 = vld [vmem:[%s7 + $0x8] sm:$0xff]
  %v1997 = vld [vmem:[%s7 + $0x10] sm:$0xff]
  %v1998 = vld [vmem:[%s7 + $0x18] sm:$0xff]
  %v1999 = vld [vmem:[%s8] sm:$0x1]
  %v2001 = vlaneseq
  %v2002 = vshrl.u32 %v2001, 7
  %v2003 = vsub.s32 0, %v2002
  %v2004 = vrot.slane %v1999, %v2003
  %v2007 = vsel %vm766, %v1931, 0
  %v2010 = vsel %vm766, %v1932, 0
  %v2013 = vsel %vm766, %v1933, 0
  %v2016 = vsel %vm766, %v1934, 0
  %v2019 = vsel %vm766, %v1935, 0
  %v2022 = vsel %vm766, %v1936, 0
  %v2025 = vsel %vm766, %v1937, 0
  %v2028 = vsel %vm766, %v1938, 0
  %v2031 = vsel %vm766, %v1939, 0
  %v2034 = vsel %vm766, %v1940, 0
  %v2037 = vsel %vm766, %v1941, 0
  %v2040 = vsel %vm766, %v1942, 0
  %v2043 = vsel %vm766, %v1943, 0
  %v2046 = vsel %vm766, %v1944, 0
  %v2049 = vsel %vm766, %v1945, 0
  %v2052 = vsel %vm766, %v1946, 0
  %v2055 = vsel %vm766, %v1947, 0
  %v2058 = vsel %vm766, %v1948, 0
  %v2061 = vsel %vm766, %v1949, 0
  %v2064 = vsel %vm766, %v1950, 0
  %v2067 = vsel %vm766, %v1951, 0
  %v2070 = vsel %vm766, %v1952, 0
  %v2073 = vsel %vm766, %v1953, 0
  %v2076 = vsel %vm766, %v1954, 0
  %v2079 = vsel %vm766, %v1955, 0
  %v2082 = vsel %vm766, %v1956, 0
  %v2085 = vsel %vm766, %v1957, 0
  %v2088 = vsel %vm766, %v1958, 0
  %v2091 = vsel %vm766, %v1959, 0
  %v2094 = vsel %vm766, %v1960, 0
  %v2097 = vsel %vm766, %v1961, 0
  %v2100 = vsel %vm766, %v1962, 0
  %v2103 = vsel %vm766, %v1963, 0
  %v2106 = vsel %vm766, %v1964, 0
  %v2109 = vsel %vm766, %v1965, 0
  %v2112 = vsel %vm766, %v1966, 0
  %v2115 = vsel %vm766, %v1967, 0
  %v2118 = vsel %vm766, %v1968, 0
  %v2121 = vsel %vm766, %v1969, 0
  %v2124 = vsel %vm766, %v1970, 0
  %v2127 = vsel %vm766, %v1971, 0
  %v2130 = vsel %vm766, %v1972, 0
  %v2133 = vsel %vm766, %v1973, 0
  %v2136 = vsel %vm766, %v1974, 0
  %v2139 = vsel %vm766, %v1975, 0
  %v2142 = vsel %vm766, %v1976, 0
  %v2145 = vsel %vm766, %v1977, 0
  %v2148 = vsel %vm766, %v1978, 0
  %v2151 = vsel %vm766, %v1979, 0
  %v2154 = vsel %vm766, %v1980, 0
  %v2157 = vsel %vm766, %v1981, 0
  %v2160 = vsel %vm766, %v1982, 0
  %v2163 = vsel %vm766, %v1983, 0
  %v2166 = vsel %vm766, %v1984, 0
  %v2169 = vsel %vm766, %v1985, 0
  %v2172 = vsel %vm766, %v1986, 0
  %v2175 = vsel %vm766, %v1987, 0
  %v2178 = vsel %vm766, %v1988, 0
  %v2181 = vsel %vm766, %v1989, 0
  %v2184 = vsel %vm766, %v1990, 0
  %v2187 = vsel %vm766, %v1991, 0
  %v2190 = vsel %vm766, %v1992, 0
  %v2193 = vsel %vm766, %v1993, 0
  %v2196 = vsel %vm766, %v1994, 0
  %2198 = vmatprep.subr.mxu0 0.0
  %2199 = vmatpush1.msra.mxu0 %v1995
  %2200 = vmatprep.subr.mxu0 0.0
  %2201 = vmatpush1.msra.mxu0 %v1996
  %2202 = vmatprep.subr.mxu0 0.0
  %2203 = vmatpush1.msra.mxu0 %v1997
  %2204 = vmatprep.subr.mxu0 0.0
  %2205 = vmatpush1.msra.mxu0 %v1998
  %2206 = vmatprep.subr.mxu0 0.0
  %2207 = vmatpush1.msra.mxu0 0.0
  %2208 = vmatprep.subr.mxu0 0.0
  %2209 = vmatpush1.msra.mxu0 0.0
  %2210 = vmatprep.subr.mxu0 0.0
  %2211 = vmatpush1.msra.mxu0 0.0
  %2212 = vmatprep.subr.mxu0 0.0
  %2213 = vmatpush1.msra.mxu0 0.0
  %2214 = vmatprep.subr.mxu0 0.0
  %2215 = vmatpush1.msra.mxu0 0.0
  %2216 = vmatprep.subr.mxu0 0.0
  %2217 = vmatpush1.msra.mxu0 0.0
  %2218 = vmatprep.subr.mxu0 0.0
  %2219 = vmatpush1.msra.mxu0 0.0
  %2220 = vmatprep.subr.mxu0 0.0
  %2221 = vmatpush1.msra.mxu0 0.0
  %2222 = vmatprep.subr.mxu0 0.0
  %2223 = vmatpush1.msra.mxu0 0.0
  %2224 = vmatprep.subr.mxu0 0.0
  %2225 = vmatpush1.msra.mxu0 0.0
  %2226 = vmatprep.subr.mxu0 0.0
  %2227 = vmatpush1.msra.mxu0 0.0
  %2228 = vmatprep.subr.mxu0 0.0
  %2229 = vmatpush1.msra.mxu0 0.0
  %2230 = vmatprep.subr.mxu0 0.0
  %2231 = vmatpush1.msra.mxu0 0.0
  %2232 = vmatprep.subr.mxu0 0.0
  %2233 = vmatpush1.msra.mxu0 0.0
  %2234 = vmatprep.subr.mxu0 0.0
  %2235 = vmatpush1.msra.mxu0 0.0
  %2236 = vmatprep.subr.mxu0 0.0
  %2237 = vmatpush1.msra.mxu0 0.0
  %2238 = vmatprep.subr.mxu0 0.0
  %2239 = vmatpush1.msra.mxu0 0.0
  %2240 = vmatprep.subr.mxu0 0.0
  %2241 = vmatpush1.msra.mxu0 0.0
  %2242 = vmatprep.subr.mxu0 0.0
  %2243 = vmatpush1.msra.mxu0 0.0
  %2244 = vmatprep.subr.mxu0 0.0
  %2245 = vmatpush1.msra.mxu0 0.0
  %2246 = vmatprep.subr.mxu0 0.0
  %2247 = vmatpush1.msra.mxu0 0.0
  %2248 = vmatprep.subr.mxu0 0.0
  %2249 = vmatpush1.msra.mxu0 0.0
  %2250 = vmatprep.subr.mxu0 0.0
  %2251 = vmatpush1.msra.mxu0 0.0
  %2252 = vmatprep.subr.mxu0 0.0
  %2253 = vmatpush1.msra.mxu0 0.0
  %2254 = vmatprep.subr.mxu0 0.0
  %2255 = vmatpush1.msra.mxu0 0.0
  %2256 = vmatprep.subr.mxu0 0.0
  %2257 = vmatpush1.msra.mxu0 0.0
  %2258 = vmatprep.subr.mxu0 0.0
  %2259 = vmatpush1.msra.mxu0 0.0
  %2260 = vmatprep.subr.mxu0 0.0
  %2261 = vmatpush1.msra.mxu0 0.0
  %2262 = vmatprep.mubr.f32.mxu0 0.0
  %2263 = vmatmul.mubr.f32.gmra.mrb[0].mxu0 %v2007
  %v2264 = vpop.f32.mrb[0].mxu0
  %v2265 = vadd.f32 %v2004, %v2264
  %v2266 = vpop.f32.mrb[0].mxu0
  %2267 = vmatprep.mubr.f32.mxu0 0.0
  %2268 = vmatmul.mubr.f32.gmra.mrb[0].mxu0 %v2010
  %v2269 = vpop.f32.mrb[0].mxu0
  %v2270 = vadd.f32 %v2004, %v2269
  %v2271 = vpop.f32.mrb[0].mxu0
  %2272 = vmatprep.mubr.f32.mxu0 0.0
  %2273 = vmatmul.mubr.f32.gmra.mrb[0].mxu0 %v2013
  %v2274 = vpop.f32.mrb[0].mxu0
  %v2275 = vadd.f32 %v2004, %v2274
  %v2276 = vpop.f32.mrb[0].mxu0
  %2277 = vmatprep.mubr.f32.mxu0 0.0
  %2278 = vmatmul.mubr.f32.gmra.mrb[0].mxu0 %v2016
  %v2279 = vpop.f32.mrb[0].mxu0
  %v2280 = vadd.f32 %v2004, %v2279
  %v2281 = vpop.f32.mrb[0].mxu0
  %2282 = vmatprep.mubr.f32.mxu0 0.0
  %2283 = vmatmul.mubr.f32.gmra.mrb[0].mxu0 %v2019
  %v2284 = vpop.f32.mrb[0].mxu0
  %v2285 = vadd.f32 %v2004, %v2284
  %v2286 = vpop.f32.mrb[0].mxu0
  %2287 = vmatprep.mubr.f32.mxu0 0.0
  %2288 = vmatmul.mubr.f32.gmra.mrb[0].mxu0 %v2022
  %v2289 = vpop.f32.mrb[0].mxu0
  %v2290 = vadd.f32 %v2004, %v2289
  %v2291 = vpop.f32.mrb[0].mxu0
  %2292 = vmatprep.mubr.f32.mxu0 0.0
  %2293 = vmatmul.mubr.f32.gmra.mrb[0].mxu0 %v2025
  %v2294 = vpop.f32.mrb[0].mxu0
  %v2295 = vadd.f32 %v2004, %v2294
  %v2296 = vpop.f32.mrb[0].mxu0
  %2297 = vmatprep.mubr.f32.mxu0 0.0
  %2298 = vmatmul.mubr.f32.gmra.mrb[0].mxu0 %v2028
  %v2299 = vpop.f32.mrb[0].mxu0
  %v2300 = vadd.f32 %v2004, %v2299
  %v2301 = vpop.f32.mrb[0].mxu0
  %2302 = vmatprep.mubr.f32.mxu0 0.0
  %2303 = vmatmul.mubr.f32.gmra.mrb[0].mxu0 %v2031
  %v2304 = vpop.f32.mrb[0].mxu0
  %v2305 = vadd.f32 %v2004, %v2304
  %v2306 = vpop.f32.mrb[0].mxu0
  %2307 = vmatprep.mubr.f32.mxu0 0.0
  %2308 = vmatmul.mubr.f32.gmra.mrb[0].mxu0 %v2034
  %v2309 = vpop.f32.mrb[0].mxu0
  %v2310 = vadd.f32 %v2004, %v2309
  %v2311 = vpop.f32.mrb[0].mxu0
  %2312 = vmatprep.mubr.f32.mxu0 0.0
  %2313 = vmatmul.mubr.f32.gmra.mrb[0].mxu0 %v2037
  %v2314 = vpop.f32.mrb[0].mxu0
  %v2315 = vadd.f32 %v2004, %v2314
  %v2316 = vpop.f32.mrb[0].mxu0
  %2317 = vmatprep.mubr.f32.mxu0 0.0
  %2318 = vmatmul.mubr.f32.gmra.mrb[0].mxu0 %v2040
  %v2319 = vpop.f32.mrb[0].mxu0
  %v2320 = vadd.f32 %v2004, %v2319
  %v2321 = vpop.f32.mrb[0].mxu0
  %2322 = vmatprep.mubr.f32.mxu0 0.0
  %2323 = vmatmul.mubr.f32.gmra.mrb[0].mxu0 %v2043
  %v2324 = vpop.f32.mrb[0].mxu0
  %v2325 = vadd.f32 %v2004, %v2324
  %v2326 = vpop.f32.mrb[0].mxu0
  %2327 = vmatprep.mubr.f32.mxu0 0.0
  %2328 = vmatmul.mubr.f32.gmra.mrb[0].mxu0 %v2046
  %v2329 = vpop.f32.mrb[0].mxu0
  %v2330 = vadd.f32 %v2004, %v2329
  %v2331 = vpop.f32.mrb[0].mxu0
  %2332 = vmatprep.mubr.f32.mxu0 0.0
  %2333 = vmatmul.mubr.f32.gmra.mrb[0].mxu0 %v2049
  %v2334 = vpop.f32.mrb[0].mxu0
  %v2335 = vadd.f32 %v2004, %v2334
  %v2336 = vpop.f32.mrb[0].mxu0
  %2337 = vmatprep.mubr.f32.mxu0 0.0
  %2338 = vmatmul.mubr.f32.gmra.mrb[0].mxu0 %v2052
  %v2339 = vpop.f32.mrb[0].mxu0
  %v2340 = vadd.f32 %v2004, %v2339
  %v2341 = vpop.f32.mrb[0].mxu0
  %2342 = vmatprep.mubr.f32.mxu0 0.0
  %2343 = vmatmul.mubr.f32.gmra.mrb[0].mxu0 %v2055
  %v2344 = vpop.f32.mrb[0].mxu0
  %v2345 = vadd.f32 %v2004, %v2344
  %v2346 = vpop.f32.mrb[0].mxu0
  %2347 = vmatprep.mubr.f32.mxu0 0.0
  %2348 = vmatmul.mubr.f32.gmra.mrb[0].mxu0 %v2058
  %v2349 = vpop.f32.mrb[0].mxu0
  %v2350 = vadd.f32 %v2004, %v2349
  %v2351 = vpop.f32.mrb[0].mxu0
  %2352 = vmatprep.mubr.f32.mxu0 0.0
  %2353 = vmatmul.mubr.f32.gmra.mrb[0].mxu0 %v2061
  %v2354 = vpop.f32.mrb[0].mxu0
  %v2355 = vadd.f32 %v2004, %v2354
  %v2356 = vpop.f32.mrb[0].mxu0
  %2357 = vmatprep.mubr.f32.mxu0 0.0
  %2358 = vmatmul.mubr.f32.gmra.mrb[0].mxu0 %v2064
  %v2359 = vpop.f32.mrb[0].mxu0
  %v2360 = vadd.f32 %v2004, %v2359
  %v2361 = vpop.f32.mrb[0].mxu0
  %2362 = vmatprep.mubr.f32.mxu0 0.0
  %2363 = vmatmul.mubr.f32.gmra.mrb[0].mxu0 %v2067
  %v2364 = vpop.f32.mrb[0].mxu0
  %v2365 = vadd.f32 %v2004, %v2364
  %v2366 = vpop.f32.mrb[0].mxu0
  %2367 = vmatprep.mubr.f32.mxu0 0.0
  %2368 = vmatmul.mubr.f32.gmra.mrb[0].mxu0 %v2070
  %v2369 = vpop.f32.mrb[0].mxu0
  %v2370 = vadd.f32 %v2004, %v2369
  %v2371 = vpop.f32.mrb[0].mxu0
  %2372 = vmatprep.mubr.f32.mxu0 0.0
  %2373 = vmatmul.mubr.f32.gmra.mrb[0].mxu0 %v2073
  %v2374 = vpop.f32.mrb[0].mxu0
  %v2375 = vadd.f32 %v2004, %v2374
  %v2376 = vpop.f32.mrb[0].mxu0
  %2377 = vmatprep.mubr.f32.mxu0 0.0
  %2378 = vmatmul.mubr.f32.gmra.mrb[0].mxu0 %v2076
  %v2379 = vpop.f32.mrb[0].mxu0
  %v2380 = vadd.f32 %v2004, %v2379
  %v2381 = vpop.f32.mrb[0].mxu0
  %2382 = vmatprep.mubr.f32.mxu0 0.0
  %2383 = vmatmul.mubr.f32.gmra.mrb[0].mxu0 %v2079
  %v2384 = vpop.f32.mrb[0].mxu0
  %v2385 = vadd.f32 %v2004, %v2384
  %v2386 = vpop.f32.mrb[0].mxu0
  %2387 = vmatprep.mubr.f32.mxu0 0.0
  %2388 = vmatmul.mubr.f32.gmra.mrb[0].mxu0 %v2082
  %v2389 = vpop.f32.mrb[0].mxu0
  %v2390 = vadd.f32 %v2004, %v2389
  %v2391 = vpop.f32.mrb[0].mxu0
  %2392 = vmatprep.mubr.f32.mxu0 0.0
  %2393 = vmatmul.mubr.f32.gmra.mrb[0].mxu0 %v2085
  %v2394 = vpop.f32.mrb[0].mxu0
  %v2395 = vadd.f32 %v2004, %v2394
  %v2396 = vpop.f32.mrb[0].mxu0
  %2397 = vmatprep.mubr.f32.mxu0 0.0
  %2398 = vmatmul.mubr.f32.gmra.mrb[0].mxu0 %v2088
  %v2399 = vpop.f32.mrb[0].mxu0
  %v2400 = vadd.f32 %v2004, %v2399
  %v2401 = vpop.f32.mrb[0].mxu0
  %2402 = vmatprep.mubr.f32.mxu0 0.0
  %2403 = vmatmul.mubr.f32.gmra.mrb[0].mxu0 %v2091
  %v2404 = vpop.f32.mrb[0].mxu0
  %v2405 = vadd.f32 %v2004, %v2404
  %v2406 = vpop.f32.mrb[0].mxu0
  %2407 = vmatprep.mubr.f32.mxu0 0.0
  %2408 = vmatmul.mubr.f32.gmra.mrb[0].mxu0 %v2094
  %v2409 = vpop.f32.mrb[0].mxu0
  %v2410 = vadd.f32 %v2004, %v2409
  %v2411 = vpop.f32.mrb[0].mxu0
  %2412 = vmatprep.mubr.f32.mxu0 0.0
  %2413 = vmatmul.mubr.f32.gmra.mrb[0].mxu0 %v2097
  %v2414 = vpop.f32.mrb[0].mxu0
  %v2415 = vadd.f32 %v2004, %v2414
  %v2416 = vpop.f32.mrb[0].mxu0
  %2417 = vmatprep.mubr.f32.mxu0 0.0
  %2418 = vmatmul.mubr.f32.gmra.mrb[0].mxu0 %v2100
  %v2419 = vpop.f32.mrb[0].mxu0
  %v2420 = vadd.f32 %v2004, %v2419
  %v2421 = vpop.f32.mrb[0].mxu0
  %2422 = vmatprep.mubr.f32.mxu0 0.0
  %2423 = vmatmul.mubr.f32.gmra.mrb[0].mxu0 %v2103
  %v2424 = vpop.f32.mrb[0].mxu0
  %v2425 = vadd.f32 %v2004, %v2424
  %v2426 = vpop.f32.mrb[0].mxu0
  %2427 = vmatprep.mubr.f32.mxu0 0.0
  %2428 = vmatmul.mubr.f32.gmra.mrb[0].mxu0 %v2106
  %v2429 = vpop.f32.mrb[0].mxu0
  %v2430 = vadd.f32 %v2004, %v2429
  %v2431 = vpop.f32.mrb[0].mxu0
  %2432 = vmatprep.mubr.f32.mxu0 0.0
  %2433 = vmatmul.mubr.f32.gmra.mrb[0].mxu0 %v2109
  %v2434 = vpop.f32.mrb[0].mxu0
  %v2435 = vadd.f32 %v2004, %v2434
  %v2436 = vpop.f32.mrb[0].mxu0
  %2437 = vmatprep.mubr.f32.mxu0 0.0
  %2438 = vmatmul.mubr.f32.gmra.mrb[0].mxu0 %v2112
  %v2439 = vpop.f32.mrb[0].mxu0
  %v2440 = vadd.f32 %v2004, %v2439
  %v2441 = vpop.f32.mrb[0].mxu0
  %2442 = vmatprep.mubr.f32.mxu0 0.0
  %2443 = vmatmul.mubr.f32.gmra.mrb[0].mxu0 %v2115
  %v2444 = vpop.f32.mrb[0].mxu0
  %v2445 = vadd.f32 %v2004, %v2444
  %v2446 = vpop.f32.mrb[0].mxu0
  %2447 = vmatprep.mubr.f32.mxu0 0.0
  %2448 = vmatmul.mubr.f32.gmra.mrb[0].mxu0 %v2118
  %v2449 = vpop.f32.mrb[0].mxu0
  %v2450 = vadd.f32 %v2004, %v2449
  %v2451 = vpop.f32.mrb[0].mxu0
  %2452 = vmatprep.mubr.f32.mxu0 0.0
  %2453 = vmatmul.mubr.f32.gmra.mrb[0].mxu0 %v2121
  %v2454 = vpop.f32.mrb[0].mxu0
  %v2455 = vadd.f32 %v2004, %v2454
  %v2456 = vpop.f32.mrb[0].mxu0
  %2457 = vmatprep.mubr.f32.mxu0 0.0
  %2458 = vmatmul.mubr.f32.gmra.mrb[0].mxu0 %v2124
  %v2459 = vpop.f32.mrb[0].mxu0
  %v2460 = vadd.f32 %v2004, %v2459
  %v2461 = vpop.f32.mrb[0].mxu0
  %2462 = vmatprep.mubr.f32.mxu0 0.0
  %2463 = vmatmul.mubr.f32.gmra.mrb[0].mxu0 %v2127
  %v2464 = vpop.f32.mrb[0].mxu0
  %v2465 = vadd.f32 %v2004, %v2464
  %v2466 = vpop.f32.mrb[0].mxu0
  %2467 = vmatprep.mubr.f32.mxu0 0.0
  %2468 = vmatmul.mubr.f32.gmra.mrb[0].mxu0 %v2130
  %v2469 = vpop.f32.mrb[0].mxu0
  %v2470 = vadd.f32 %v2004, %v2469
  %v2471 = vpop.f32.mrb[0].mxu0
  %2472 = vmatprep.mubr.f32.mxu0 0.0
  %2473 = vmatmul.mubr.f32.gmra.mrb[0].mxu0 %v2133
  %v2474 = vpop.f32.mrb[0].mxu0
  %v2475 = vadd.f32 %v2004, %v2474
  %v2476 = vpop.f32.mrb[0].mxu0
  %2477 = vmatprep.mubr.f32.mxu0 0.0
  %2478 = vmatmul.mubr.f32.gmra.mrb[0].mxu0 %v2136
  %v2479 = vpop.f32.mrb[0].mxu0
  %v2480 = vadd.f32 %v2004, %v2479
  %v2481 = vpop.f32.mrb[0].mxu0
  %2482 = vmatprep.mubr.f32.mxu0 0.0
  %2483 = vmatmul.mubr.f32.gmra.mrb[0].mxu0 %v2139
  %v2484 = vpop.f32.mrb[0].mxu0
  %v2485 = vadd.f32 %v2004, %v2484
  %v2486 = vpop.f32.mrb[0].mxu0
  %2487 = vmatprep.mubr.f32.mxu0 0.0
  %2488 = vmatmul.mubr.f32.gmra.mrb[0].mxu0 %v2142
  %v2489 = vpop.f32.mrb[0].mxu0
  %v2490 = vadd.f32 %v2004, %v2489
  %v2491 = vpop.f32.mrb[0].mxu0
  %2492 = vmatprep.mubr.f32.mxu0 0.0
  %2493 = vmatmul.mubr.f32.gmra.mrb[0].mxu0 %v2145
  %v2494 = vpop.f32.mrb[0].mxu0
  %v2495 = vadd.f32 %v2004, %v2494
  %v2496 = vpop.f32.mrb[0].mxu0
  %2497 = vmatprep.mubr.f32.mxu0 0.0
  %2498 = vmatmul.mubr.f32.gmra.mrb[0].mxu0 %v2148
  %v2499 = vpop.f32.mrb[0].mxu0
  %v2500 = vadd.f32 %v2004, %v2499
  %v2501 = vpop.f32.mrb[0].mxu0
  %2502 = vmatprep.mubr.f32.mxu0 0.0
  %2503 = vmatmul.mubr.f32.gmra.mrb[0].mxu0 %v2151
  %v2504 = vpop.f32.mrb[0].mxu0
  %v2505 = vadd.f32 %v2004, %v2504
  %v2506 = vpop.f32.mrb[0].mxu0
  %2507 = vmatprep.mubr.f32.mxu0 0.0
  %2508 = vmatmul.mubr.f32.gmra.mrb[0].mxu0 %v2154
  %v2509 = vpop.f32.mrb[0].mxu0
  %v2510 = vadd.f32 %v2004, %v2509
  %v2511 = vpop.f32.mrb[0].mxu0
  %2512 = vmatprep.mubr.f32.mxu0 0.0
  %2513 = vmatmul.mubr.f32.gmra.mrb[0].mxu0 %v2157
  %v2514 = vpop.f32.mrb[0].mxu0
  %v2515 = vadd.f32 %v2004, %v2514
  %v2516 = vpop.f32.mrb[0].mxu0
  %2517 = vmatprep.mubr.f32.mxu0 0.0
  %2518 = vmatmul.mubr.f32.gmra.mrb[0].mxu0 %v2160
  %v2519 = vpop.f32.mrb[0].mxu0
  %v2520 = vadd.f32 %v2004, %v2519
  %v2521 = vpop.f32.mrb[0].mxu0
  %2522 = vmatprep.mubr.f32.mxu0 0.0
  %2523 = vmatmul.mubr.f32.gmra.mrb[0].mxu0 %v2163
  %v2524 = vpop.f32.mrb[0].mxu0
  %v2525 = vadd.f32 %v2004, %v2524
  %v2526 = vpop.f32.mrb[0].mxu0
  %2527 = vmatprep.mubr.f32.mxu0 0.0
  %2528 = vmatmul.mubr.f32.gmra.mrb[0].mxu0 %v2166
  %v2529 = vpop.f32.mrb[0].mxu0
  %v2530 = vadd.f32 %v2004, %v2529
  %v2531 = vpop.f32.mrb[0].mxu0
  %2532 = vmatprep.mubr.f32.mxu0 0.0
  %2533 = vmatmul.mubr.f32.gmra.mrb[0].mxu0 %v2169
  %v2534 = vpop.f32.mrb[0].mxu0
  %v2535 = vadd.f32 %v2004, %v2534
  %v2536 = vpop.f32.mrb[0].mxu0
  %2537 = vmatprep.mubr.f32.mxu0 0.0
  %2538 = vmatmul.mubr.f32.gmra.mrb[0].mxu0 %v2172
  %v2539 = vpop.f32.mrb[0].mxu0
  %v2540 = vadd.f32 %v2004, %v2539
  %v2541 = vpop.f32.mrb[0].mxu0
  %2542 = vmatprep.mubr.f32.mxu0 0.0
  %2543 = vmatmul.mubr.f32.gmra.mrb[0].mxu0 %v2175
  %v2544 = vpop.f32.mrb[0].mxu0
  %v2545 = vadd.f32 %v2004, %v2544
  %v2546 = vpop.f32.mrb[0].mxu0
  %2547 = vmatprep.mubr.f32.mxu0 0.0
  %2548 = vmatmul.mubr.f32.gmra.mrb[0].mxu0 %v2178
  %v2549 = vpop.f32.mrb[0].mxu0
  %v2550 = vadd.f32 %v2004, %v2549
  %v2551 = vpop.f32.mrb[0].mxu0
  %2552 = vmatprep.mubr.f32.mxu0 0.0
  %2553 = vmatmul.mubr.f32.gmra.mrb[0].mxu0 %v2181
  %v2554 = vpop.f32.mrb[0].mxu0
  %v2555 = vadd.f32 %v2004, %v2554
  %v2556 = vpop.f32.mrb[0].mxu0
  %2557 = vmatprep.mubr.f32.mxu0 0.0
  %2558 = vmatmul.mubr.f32.gmra.mrb[0].mxu0 %v2184
  %v2559 = vpop.f32.mrb[0].mxu0
  %v2560 = vadd.f32 %v2004, %v2559
  %v2561 = vpop.f32.mrb[0].mxu0
  %2562 = vmatprep.mubr.f32.mxu0 0.0
  %2563 = vmatmul.mubr.f32.gmra.mrb[0].mxu0 %v2187
  %v2564 = vpop.f32.mrb[0].mxu0
  %v2565 = vadd.f32 %v2004, %v2564
  %v2566 = vpop.f32.mrb[0].mxu0
  %2567 = vmatprep.mubr.f32.mxu0 0.0
  %2568 = vmatmul.mubr.f32.gmra.mrb[0].mxu0 %v2190
  %v2569 = vpop.f32.mrb[0].mxu0
  %v2570 = vadd.f32 %v2004, %v2569
  %v2571 = vpop.f32.mrb[0].mxu0
  %2572 = vmatprep.mubr.f32.mxu0 0.0
  %2573 = vmatmul.mubr.f32.gmra.mrb[0].mxu0 %v2193
  %v2574 = vpop.f32.mrb[0].mxu0
  %v2575 = vadd.f32 %v2004, %v2574
  %v2576 = vpop.f32.mrb[0].mxu0
  %2577 = vmatprep.mubr.f32.mxu0 0.0
  %2578 = vmatmul.mubr.f32.gmra.mrb[0].mxu0 %v2196
  %v2579 = vpop.f32.mrb[0].mxu0
  %v2580 = vadd.f32 %v2004, %v2579
  %v2581 = vpop.f32.mrb[0].mxu0
  %2582 = vdwg.mxu0
  %2583 = vst.msk [vmem:[%s9] sm:$0xff] %vm113, %v2265
  %2584 = vst.msk [vmem:[%s9 + $0x8] sm:$0xff] %vm113, %v2270
  %2585 = vst.msk [vmem:[%s9 + $0x10] sm:$0xff] %vm113, %v2275
  %2586 = vst.msk [vmem:[%s9 + $0x18] sm:$0xff] %vm113, %v2280
  %2587 = vst.msk [vmem:[%s9 + $0x20] sm:$0xff] %vm113, %v2285
  %2588 = vst.msk [vmem:[%s9 + $0x28] sm:$0xff] %vm113, %v2290
  %2589 = vst.msk [vmem:[%s9 + $0x30] sm:$0xff] %vm113, %v2295
  %2590 = vst.msk [vmem:[%s9 + $0x38] sm:$0xff] %vm113, %v2300
  %2591 = vst.msk [vmem:[%s9 + $0x40] sm:$0xff] %vm113, %v2305
  %2592 = vst.msk [vmem:[%s9 + $0x48] sm:$0xff] %vm113, %v2310
  %2593 = vst.msk [vmem:[%s9 + $0x50] sm:$0xff] %vm113, %v2315
  %2594 = vst.msk [vmem:[%s9 + $0x58] sm:$0xff] %vm113, %v2320
  %2595 = vst.msk [vmem:[%s9 + $0x60] sm:$0xff] %vm113, %v2325
  %2596 = vst.msk [vmem:[%s9 + $0x68] sm:$0xff] %vm113, %v2330
  %2597 = vst.msk [vmem:[%s9 + $0x70] sm:$0xff] %vm113, %v2335
  %2598 = vst.msk [vmem:[%s9 + $0x78] sm:$0xff] %vm113, %v2340
  %2599 = vst.msk [vmem:[%s9 + $0x80] sm:$0xff] %vm113, %v2345
  %2600 = vst.msk [vmem:[%s9 + $0x88] sm:$0xff] %vm113, %v2350
  %2601 = vst.msk [vmem:[%s9 + $0x90] sm:$0xff] %vm113, %v2355
  %2602 = vst.msk [vmem:[%s9 + $0x98] sm:$0xff] %vm113, %v2360
  %2603 = vst.msk [vmem:[%s9 + $0xa0] sm:$0xff] %vm113, %v2365
  %2604 = vst.msk [vmem:[%s9 + $0xa8] sm:$0xff] %vm113, %v2370
  %2605 = vst.msk [vmem:[%s9 + $0xb0] sm:$0xff] %vm113, %v2375
  %2606 = vst.msk [vmem:[%s9 + $0xb8] sm:$0xff] %vm113, %v2380
  %2607 = vst.msk [vmem:[%s9 + $0xc0] sm:$0xff] %vm113, %v2385
  %2608 = vst.msk [vmem:[%s9 + $0xc8] sm:$0xff] %vm113, %v2390
  %2609 = vst.msk [vmem:[%s9 + $0xd0] sm:$0xff] %vm113, %v2395
  %2610 = vst.msk [vmem:[%s9 + $0xd8] sm:$0xff] %vm113, %v2400
  %2611 = vst.msk [vmem:[%s9 + $0xe0] sm:$0xff] %vm113, %v2405
  %2612 = vst.msk [vmem:[%s9 + $0xe8] sm:$0xff] %vm113, %v2410
  %2613 = vst.msk [vmem:[%s9 + $0xf0] sm:$0xff] %vm113, %v2415
  %2614 = vst.msk [vmem:[%s9 + $0xf8] sm:$0xff] %vm113, %v2420
  %2615 = vst.msk [vmem:[%s9 + $0x100] sm:$0xff] %vm113, %v2425
  %2616 = vst.msk [vmem:[%s9 + $0x108] sm:$0xff] %vm113, %v2430
  %2617 = vst.msk [vmem:[%s9 + $0x110] sm:$0xff] %vm113, %v2435
  %2618 = vst.msk [vmem:[%s9 + $0x118] sm:$0xff] %vm113, %v2440
  %2619 = vst.msk [vmem:[%s9 + $0x120] sm:$0xff] %vm113, %v2445
  %2620 = vst.msk [vmem:[%s9 + $0x128] sm:$0xff] %vm113, %v2450
  %2621 = vst.msk [vmem:[%s9 + $0x130] sm:$0xff] %vm113, %v2455
  %2622 = vst.msk [vmem:[%s9 + $0x138] sm:$0xff] %vm113, %v2460
  %2623 = vst.msk [vmem:[%s9 + $0x140] sm:$0xff] %vm113, %v2465
  %2624 = vst.msk [vmem:[%s9 + $0x148] sm:$0xff] %vm113, %v2470
  %2625 = vst.msk [vmem:[%s9 + $0x150] sm:$0xff] %vm113, %v2475
  %2626 = vst.msk [vmem:[%s9 + $0x158] sm:$0xff] %vm113, %v2480
  %2627 = vst.msk [vmem:[%s9 + $0x160] sm:$0xff] %vm113, %v2485
  %2628 = vst.msk [vmem:[%s9 + $0x168] sm:$0xff] %vm113, %v2490
  %2629 = vst.msk [vmem:[%s9 + $0x170] sm:$0xff] %vm113, %v2495
  %2630 = vst.msk [vmem:[%s9 + $0x178] sm:$0xff] %vm113, %v2500
  %2631 = vst.msk [vmem:[%s9 + $0x180] sm:$0xff] %vm113, %v2505
  %2632 = vst.msk [vmem:[%s9 + $0x188] sm:$0xff] %vm113, %v2510
  %2633 = vst.msk [vmem:[%s9 + $0x190] sm:$0xff] %vm113, %v2515
  %2634 = vst.msk [vmem:[%s9 + $0x198] sm:$0xff] %vm113, %v2520
  %2635 = vst.msk [vmem:[%s9 + $0x1a0] sm:$0xff] %vm113, %v2525
  %2636 = vst.msk [vmem:[%s9 + $0x1a8] sm:$0xff] %vm113, %v2530
  %2637 = vst.msk [vmem:[%s9 + $0x1b0] sm:$0xff] %vm113, %v2535
  %2638 = vst.msk [vmem:[%s9 + $0x1b8] sm:$0xff] %vm113, %v2540
  %2639 = vst.msk [vmem:[%s9 + $0x1c0] sm:$0xff] %vm113, %v2545
  %2640 = vst.msk [vmem:[%s9 + $0x1c8] sm:$0xff] %vm113, %v2550
  %2641 = vst.msk [vmem:[%s9 + $0x1d0] sm:$0xff] %vm113, %v2555
  %2642 = vst.msk [vmem:[%s9 + $0x1d8] sm:$0xff] %vm113, %v2560
  %2643 = vst.msk [vmem:[%s9 + $0x1e0] sm:$0xff] %vm113, %v2565
  %2644 = vst.msk [vmem:[%s9 + $0x1e8] sm:$0xff] %vm113, %v2570
  %2645 = vst.msk [vmem:[%s9 + $0x1f0] sm:$0xff] %vm113, %v2575
  %2646 = vst.msk [vmem:[%s9 + $0x1f8] sm:$0xff] %vm113, %v2580
  %2647 = vst.msk [vmem:[%s10] sm:$0xff] %vm1353, %v1026
  %2648 = vst.msk [vmem:[%s10 + $0x8] sm:$0xff] %vm1353, %v1031
  %2649 = vst.msk [vmem:[%s10 + $0x10] sm:$0xff] %vm1353, %v1036
  %2650 = vst.msk [vmem:[%s10 + $0x18] sm:$0xff] %vm1353, %v1041
  %2651 = vst.msk [vmem:[%s10 + $0x20] sm:$0xff] %vm1353, %v1046
  %2652 = vst.msk [vmem:[%s10 + $0x28] sm:$0xff] %vm1353, %v1051
  %2653 = vst.msk [vmem:[%s10 + $0x30] sm:$0xff] %vm1353, %v1056
  %2654 = vst.msk [vmem:[%s10 + $0x38] sm:$0xff] %vm1353, %v1061
  %2655 = vst.msk [vmem:[%s10 + $0x40] sm:$0xff] %vm1353, %v1066
  %2656 = vst.msk [vmem:[%s10 + $0x48] sm:$0xff] %vm1353, %v1071
  %2657 = vst.msk [vmem:[%s10 + $0x50] sm:$0xff] %vm1353, %v1076
  %2658 = vst.msk [vmem:[%s10 + $0x58] sm:$0xff] %vm1353, %v1081
  %2659 = vst.msk [vmem:[%s10 + $0x60] sm:$0xff] %vm1353, %v1086
  %2660 = vst.msk [vmem:[%s10 + $0x68] sm:$0xff] %vm1353, %v1091
  %2661 = vst.msk [vmem:[%s10 + $0x70] sm:$0xff] %vm1353, %v1096
  %2662 = vst.msk [vmem:[%s10 + $0x78] sm:$0xff] %vm1353, %v1101
  %2663 = vst.msk [vmem:[%s10 + $0x80] sm:$0xff] %vm1353, %v1106
  %2664 = vst.msk [vmem:[%s10 + $0x88] sm:$0xff] %vm1353, %v1111
  %2665 = vst.msk [vmem:[%s10 + $0x90] sm:$0xff] %vm1353, %v1116
  %2666 = vst.msk [vmem:[%s10 + $0x98] sm:$0xff] %vm1353, %v1121
  %2667 = vst.msk [vmem:[%s10 + $0xa0] sm:$0xff] %vm1353, %v1126
  %2668 = vst.msk [vmem:[%s10 + $0xa8] sm:$0xff] %vm1353, %v1131
  %2669 = vst.msk [vmem:[%s10 + $0xb0] sm:$0xff] %vm1353, %v1136
  %2670 = vst.msk [vmem:[%s10 + $0xb8] sm:$0xff] %vm1353, %v1141
  %2671 = vst.msk [vmem:[%s10 + $0xc0] sm:$0xff] %vm1353, %v1146
  %2672 = vst.msk [vmem:[%s10 + $0xc8] sm:$0xff] %vm1353, %v1151
  %2673 = vst.msk [vmem:[%s10 + $0xd0] sm:$0xff] %vm1353, %v1156
  %2674 = vst.msk [vmem:[%s10 + $0xd8] sm:$0xff] %vm1353, %v1161
  %2675 = vst.msk [vmem:[%s10 + $0xe0] sm:$0xff] %vm1353, %v1166
  %2676 = vst.msk [vmem:[%s10 + $0xe8] sm:$0xff] %vm1353, %v1171
  %2677 = vst.msk [vmem:[%s10 + $0xf0] sm:$0xff] %vm1353, %v1176
  %2678 = vst.msk [vmem:[%s10 + $0xf8] sm:$0xff] %vm1353, %v1181
  %2679 = vst.msk [vmem:[%s10 + $0x100] sm:$0xff] %vm1353, %v1186
  %2680 = vst.msk [vmem:[%s10 + $0x108] sm:$0xff] %vm1353, %v1191
  %2681 = vst.msk [vmem:[%s10 + $0x110] sm:$0xff] %vm1353, %v1196
  %2682 = vst.msk [vmem:[%s10 + $0x118] sm:$0xff] %vm1353, %v1201
  %2683 = vst.msk [vmem:[%s10 + $0x120] sm:$0xff] %vm1353, %v1206
  %2684 = vst.msk [vmem:[%s10 + $0x128] sm:$0xff] %vm1353, %v1211
  %2685 = vst.msk [vmem:[%s10 + $0x130] sm:$0xff] %vm1353, %v1216
  %2686 = vst.msk [vmem:[%s10 + $0x138] sm:$0xff] %vm1353, %v1221
  %2687 = vst.msk [vmem:[%s10 + $0x140] sm:$0xff] %vm1353, %v1226
  %2688 = vst.msk [vmem:[%s10 + $0x148] sm:$0xff] %vm1353, %v1231
  %2689 = vst.msk [vmem:[%s10 + $0x150] sm:$0xff] %vm1353, %v1236
  %2690 = vst.msk [vmem:[%s10 + $0x158] sm:$0xff] %vm1353, %v1241
  %2691 = vst.msk [vmem:[%s10 + $0x160] sm:$0xff] %vm1353, %v1246
  %2692 = vst.msk [vmem:[%s10 + $0x168] sm:$0xff] %vm1353, %v1251
  %2693 = vst.msk [vmem:[%s10 + $0x170] sm:$0xff] %vm1353, %v1256
  %2694 = vst.msk [vmem:[%s10 + $0x178] sm:$0xff] %vm1353, %v1261
  %2695 = vst.msk [vmem:[%s10 + $0x180] sm:$0xff] %vm1353, %v1266
  %2696 = vst.msk [vmem:[%s10 + $0x188] sm:$0xff] %vm1353, %v1271
  %2697 = vst.msk [vmem:[%s10 + $0x190] sm:$0xff] %vm1353, %v1276
  %2698 = vst.msk [vmem:[%s10 + $0x198] sm:$0xff] %vm1353, %v1281
  %2699 = vst.msk [vmem:[%s10 + $0x1a0] sm:$0xff] %vm1353, %v1286
  %2700 = vst.msk [vmem:[%s10 + $0x1a8] sm:$0xff] %vm1353, %v1291
  %2701 = vst.msk [vmem:[%s10 + $0x1b0] sm:$0xff] %vm1353, %v1296
  %2702 = vst.msk [vmem:[%s10 + $0x1b8] sm:$0xff] %vm1353, %v1301
  %2703 = vst.msk [vmem:[%s10 + $0x1c0] sm:$0xff] %vm1353, %v1306
  %2704 = vst.msk [vmem:[%s10 + $0x1c8] sm:$0xff] %vm1353, %v1311
  %2705 = vst.msk [vmem:[%s10 + $0x1d0] sm:$0xff] %vm1353, %v1316
  %2706 = vst.msk [vmem:[%s10 + $0x1d8] sm:$0xff] %vm1353, %v1321
  %2707 = vst.msk [vmem:[%s10 + $0x1e0] sm:$0xff] %vm1353, %v1326
  %2708 = vst.msk [vmem:[%s10 + $0x1e8] sm:$0xff] %vm1353, %v1331
  %2709 = vst.msk [vmem:[%s10 + $0x1f0] sm:$0xff] %vm1353, %v1336
  %2710 = vst.msk [vmem:[%s10 + $0x1f8] sm:$0xff] %vm1353, %v1341
  // Predicated region
  $region38: #{view_specific_autoencoder.1} parent=0 // pred_check
    _
  $region39: #{view_specific_autoencoder.1} parent=0 // pred_check_branch
    %2712 = sbr.rel (0) target = $region41
  $region40: #{view_specific_autoencoder.1} parent=0 // pred_region
    _
  $region41: #{view_specific_autoencoder.1} parent=0 // pred_fallthru
    _
  // Predicated region
  $region42: #{view_specific_autoencoder.1} parent=0 // pred_check
    _
  $region43: #{view_specific_autoencoder.1} parent=0 // pred_check_branch
    %2714 = sbr.rel (0) target = $region45
  $region44: #{view_specific_autoencoder.1} parent=0 // pred_region
    _
  $region45: #{view_specific_autoencoder.1} parent=0 // pred_fallthru
    _
  // Predicated region
  $region46: #{view_specific_autoencoder.1} parent=0 // pred_check
    _
  $region47: #{view_specific_autoencoder.1} parent=0 // pred_check_branch
    %2716 = sbr.rel (0) target = $region49
  $region48: #{view_specific_autoencoder.1} parent=0 // pred_region
    _
  $region49: #{view_specific_autoencoder.1} parent=0 // pred_fallthru
    _
  // Predicated region
  $region50: #{view_specific_autoencoder.1} parent=0 // pred_check
    _
  $region51: #{view_specific_autoencoder.1} parent=0 // pred_check_branch
    %2718 = sbr.rel (0) target = $region53
  $region52: #{view_specific_autoencoder.1} parent=0 // pred_region
    _
  $region53: #{view_specific_autoencoder.1} parent=0 // pred_fallthru
    _

</llo_original>
